<compile_context>
chip_gen: v7x
topology: tpu7x:2x2x1
jax: 0.10.0
libtpu: 0.0.40
codegen_flags: <defaults>
</compile_context>

<pallas_src>
import functools

import numpy as np
import jax
import jax.numpy as jnp
from jax import lax
from jax.experimental import pallas as pl
from jax.experimental.pallas import tpu as pltpu

NUM_AA = 20        # len(constants.AA20)
NUM_CHI = 4        # chi angles per residue (max)
NUM_QUARTET = 4    # atoms defining each dihedral
NUM_ATOMS = 14     # atoms per residue in X
ATOM_PAD = 16      # padded atom axis (multiple of 8 -> clean sublane slices)
OUT_ROWS = 2 * NUM_CHI   # packed output: chi rows 0..3, mask rows 4..7

# Number of chi angles per AA, order 'ACDEFGHIKLMNPQRSTVWY'.
AA20_NUM_CHI = np.array([0, 1, 2, 3, 2, 0, 2, 2, 4, 2,
                         3, 2, 2, 3, 4, 1, 1, 1, 2, 2], dtype=np.int32)


def build_chi_atom_sets():
    # TODO(synk): real tables come from constants.AA_GEOMETRY; deterministic
    # synthetic topology is used here (same rule as the accepted baseline).
    base = np.array([0, 1, 4, 5, 6, 7, 8], dtype=np.int32)  # N, CA, CB, CG, ...
    sets = np.zeros((NUM_AA, NUM_CHI, NUM_QUARTET), dtype=np.int32)
    for aa in range(NUM_AA):
        for q in range(int(AA20_NUM_CHI[aa])):
            for k in range(NUM_QUARTET):
                sets[aa, q, k] = base[q + k]
    return sets


# ----------------------------- Pallas kernel -------------------------------
def _chi_angles_kernel(tab_ref, numchi_ref, perm_ref, s_ref, c_ref, x_ref,
                       out_ref, *, distance_eps):
    t = s_ref.shape[-1]                       # residue tile size

    s = s_ref[0]                              # (1, T) int32 sequence tokens
    c = c_ref[0]                              # (1, T) int32 chain map
    xf = x_ref[0]                             # (T, 42) f32 natural coord layout

    # --- On-chip relayout (MXU): xt[d*16 + a, n] = X[n, a, d] (rows a>=14 are 0).
    # The permutation weights are exact 0/1.  X is split into a bf16-exact part
    # plus an f32 residual so the relayout stays ~f32-accurate no matter how the
    # compiler decomposes the f32 matmul passes.
    nt_dims = (((1,), (1,)), ((), ()))        # contract last dims (A @ B^T form)
    xf_hi = xf.astype(jnp.bfloat16)
    xf_lo = xf - xf_hi.astype(jnp.float32)
    xt = (lax.dot_general(perm_ref[...].astype(jnp.bfloat16), xf_hi, nt_dims,
                          preferred_element_type=jnp.float32)
          + lax.dot_general(perm_ref[...], xf_lo, nt_dims,
                            preferred_element_type=jnp.float32))      # (48, T)
    xtd = [xt[d * ATOM_PAD:(d + 1) * ATOM_PAD, :][None, :, :]         # (1,16,T)
           for d in range(3)]

    # --- One-hot over amino-acid types, residues on lanes (bf16 for the MXU).
    # Tokens outside [0, NUM_AA) give an all-zero one-hot -> chi = mask = 0
    # (do not "fix": this is the intended behaviour for pad/unknown tokens).
    aa_iota = lax.broadcasted_iota(jnp.int32, (NUM_AA, t), 0)
    onehot = (aa_iota == jnp.broadcast_to(s, (NUM_AA, t))).astype(jnp.bfloat16)
    onehot_b = jnp.broadcast_to(onehot[None], (NUM_CHI, NUM_AA, t))   # (4,20,T)

    # Number of chi angles per residue (exact small ints): (1, T).
    nchi = jnp.dot(numchi_ref[...], onehot, preferred_element_type=jnp.float32)

    # --- Gather the 4 dihedral points, one quartet-position chunk at a time
    # (keeps only a (4, 16, T) selection slab live instead of (256, T)).
    pts = []
    for k in range(NUM_QUARTET):
        # sel[q, a, n] = 1  iff  chi_atom_sets[S[n], q, k] == a   (exact 0/1)
        sel = lax.dot_general(tab_ref[k], onehot_b,
                              (((2,), (1,)), ((0,), (0,))),
                              preferred_element_type=jnp.float32)     # (4,16,T)
        # Reduce the atom axis directly into (4, T) coordinate planes.
        pts.append([jnp.sum(sel * xtd[d], axis=1) for d in range(3)])

    # --- Dihedral geometry on (4, T) planes (VPU; rsqrt / atan2 use the EUP).
    def sub(a, b):
        return [a[i] - b[i] for i in range(3)]

    def rnorm(v):
        inv = lax.rsqrt(v[0] * v[0] + v[1] * v[1] + v[2] * v[2] + distance_eps)
        return [v[i] * inv for i in range(3)]

    def cross(a, b):
        return [a[1] * b[2] - a[2] * b[1],
                a[2] * b[0] - a[0] * b[2],
                a[0] * b[1] - a[1] * b[0]]

    def dot3(a, b):
        return a[0] * b[0] + a[1] * b[1] + a[2] * b[2]

    x1, x2, x3, x4 = pts
    u1 = rnorm(sub(x2, x1))
    u2 = rnorm(sub(x3, x2))
    u3 = rnorm(sub(x4, x3))
    n1 = rnorm(cross(u1, u2))
    n2 = rnorm(cross(u2, u3))
    cos_d = dot3(n1, n2)
    sin_d = dot3(cross(n1, n2), u2)
    chi = jnp.arctan2(sin_d, cos_d)                                   # (4, T)

    # --- chi mask: iota(4) < num_chi[S], zeroed where C <= 0.
    apr = jnp.where(jnp.broadcast_to(c, (NUM_CHI, t)) > 0,
                    jnp.broadcast_to(nchi, (NUM_CHI, t)), 0.0)
    chi_iota = lax.broadcasted_iota(jnp.int32, (NUM_CHI, t), 0).astype(jnp.float32)
    mask = (chi_iota < apr).astype(jnp.float32)

    # Single full-width (8, T) store: chi*mask in rows 0..3, mask in rows 4..7.
    out_ref[0] = jnp.concatenate([chi * mask, mask], axis=0)


# ------------------------------- wrapper ------------------------------------
def chi_angles(X, C, S, chi_atom_sets, num_chi_per_aa, distance_eps=1e-6,
               tile_n=2048):
    """chi, mask_chi = chi_angles(X, C, S); X:(B,N,14,3), C/S:(B,N)."""
    B, N, A, _ = X.shape
    assert A == NUM_ATOMS

    # Residue-axis tile: multiple of 128 when tiling, otherwise the full extent.
    if N <= tile_n:
        tn = N
    else:
        assert tile_n % 128 == 0, "tile_n must be a multiple of 128 when tiling"
        tn = tile_n
    n_tiles = pl.cdiv(N, tn)

    # Free reshapes only -- X is NOT transposed/padded on the host.
    Xr = X.astype(jnp.float32).reshape(B, N, A * 3)                   # (B, N, 42)
    S3 = S.astype(jnp.int32)[:, None, :]                              # (B, 1, N)
    C3 = C.astype(jnp.int32)[:, None, :]                              # (B, 1, N)

    # Selection table (bf16, exact 0/1): tab[k, q, a, aa] = [atom_sets[aa,q,k]==a].
    cas = np.asarray(chi_atom_sets)
    tab = np.zeros((NUM_QUARTET, NUM_CHI, ATOM_PAD, NUM_AA), dtype=np.float32)
    for aa in range(NUM_AA):
        for q in range(NUM_CHI):
            for k in range(NUM_QUARTET):
                tab[k, q, int(cas[aa, q, k]), aa] = 1.0
    tab = jnp.asarray(tab, dtype=jnp.bfloat16)

    numchi = jnp.asarray(
        np.asarray(num_chi_per_aa, dtype=np.float32).reshape(1, NUM_AA),
        dtype=jnp.bfloat16)

    # On-chip relayout matrix: xt[d*16 + a, :] = xf[:, a*3 + d]  (exact 0/1).
    perm = np.zeros((3 * ATOM_PAD, NUM_ATOMS * 3), dtype=np.float32)
    for a in range(NUM_ATOMS):
        for d in range(3):
            perm[d * ATOM_PAD + a, a * 3 + d] = 1.0
    perm = jnp.asarray(perm)

    kernel = functools.partial(_chi_angles_kernel, distance_eps=distance_eps)
    out = pl.pallas_call(
        kernel,
        out_shape=jax.ShapeDtypeStruct((B, OUT_ROWS, N), jnp.float32),
        grid=(B, n_tiles),
        in_specs=[
            pl.BlockSpec(tab.shape, lambda b, i: (0, 0, 0, 0)),       # tables
            pl.BlockSpec(numchi.shape, lambda b, i: (0, 0)),
            pl.BlockSpec(perm.shape, lambda b, i: (0, 0)),
            pl.BlockSpec((1, 1, tn), lambda b, i: (b, 0, i)),         # S
            pl.BlockSpec((1, 1, tn), lambda b, i: (b, 0, i)),         # C
            pl.BlockSpec((1, tn, NUM_ATOMS * 3), lambda b, i: (b, i, 0)),  # X
        ],
        out_specs=pl.BlockSpec((1, OUT_ROWS, tn), lambda b, i: (b, 0, i)),
        compiler_params=pltpu.CompilerParams(
            dimension_semantics=("parallel", "parallel")),
    )(tab, numchi, perm, S3, C3, Xr)

    chi = jnp.transpose(out[:, :NUM_CHI, :], (0, 2, 1))
    mask = jnp.transpose(out[:, NUM_CHI:, :], (0, 2, 1))
    return chi, mask


# --------------------------- plain-JAX reference -----------------------------
def _dihedrals_ref(X1, X2, X3, X4, eps):
    def normed(v):
        return v / jnp.sqrt(jnp.sum(v * v, axis=-1, keepdims=True) + eps)
    U1 = normed(X2 - X1)
    U2 = normed(X3 - X2)
    U3 = normed(X4 - X3)
    N1 = normed(jnp.cross(U1, U2))
    N2 = normed(jnp.cross(U2, U3))
    cos_d = jnp.sum(N1 * N2, axis=-1)
    sin_d = jnp.sum(jnp.cross(N1, N2) * U2, axis=-1)
    return jnp.arctan2(sin_d, cos_d)


def chi_angles_ref(X, C, S, chi_atom_sets, num_chi_per_aa, eps):
    B, N = S.shape
    idx = jnp.asarray(chi_atom_sets)[S]                               # (B, N, 4, 4)
    b_ix = jnp.arange(B)[:, None, None, None]
    n_ix = jnp.arange(N)[None, :, None, None]
    Xq = X[b_ix, n_ix, idx]                                           # (B, N, 4, 4, 3)
    X1, X2, X3, X4 = [Xq[:, :, :, k, :] for k in range(4)]
    chi = _dihedrals_ref(X1, X2, X3, X4, eps)
    nchi = jnp.asarray(num_chi_per_aa, jnp.float32)[S]
    nchi = jnp.where(C > 0, nchi, 0.0)
    mask = (jnp.arange(4)[None, None, :] < nchi[..., None]).astype(jnp.float32)
    return chi * mask, mask


if __name__ == "__main__":
    chi_atom_sets = build_chi_atom_sets()
    key = jax.random.PRNGKey(0)

    def run_case(B, N, tile_n):
        kx, ks, kc = jax.random.split(jax.random.fold_in(key, N), 3)
        X = jax.random.normal(kx, (B, N, NUM_ATOMS, 3), dtype=jnp.float32) * 3.0
        S = jax.random.randint(ks, (B, N), 0, NUM_AA, dtype=jnp.int32)
        C = jax.random.randint(kc, (B, N), -1, 3, dtype=jnp.int32)   # some C <= 0

        fn = jax.jit(functools.partial(
            chi_angles, chi_atom_sets=chi_atom_sets,
            num_chi_per_aa=AA20_NUM_CHI, distance_eps=1e-6, tile_n=tile_n))
        chi, mask = fn(X, C, S)
        chi = jax.block_until_ready(chi)
        mask = jax.block_until_ready(mask)

        chi_r, mask_r = chi_angles_ref(X, C, S, chi_atom_sets, AA20_NUM_CHI, 1e-6)
        assert chi.shape == (B, N, 4) and mask.shape == (B, N, 4)
        np.testing.assert_allclose(np.asarray(mask), np.asarray(mask_r), atol=1e-6)
        np.testing.assert_allclose(np.asarray(chi), np.asarray(chi_r),
                                   rtol=1e-4, atol=1e-4)

    run_case(B=2, N=8, tile_n=2048)     # tiny: single full-extent block
    run_case(B=2, N=200, tile_n=128)    # multi-tile grid + partial last tile
    print("KERNEL_OK")
</pallas_src>

<mosaic_0001>
module attributes {stable_mosaic.version = 11 : i64} {
  func.func @_chi_angles_kernel(%arg0: i32, %arg1: i32, %arg2: memref<4x4x16x20xbf16, #tpu.memory_space<vmem>>, %arg3: memref<1x20xbf16, #tpu.memory_space<vmem>>, %arg4: memref<48x42xf32, #tpu.memory_space<vmem>>, %arg5: memref<1x1x8xi32, #tpu.memory_space<vmem>>, %arg6: memref<1x1x8xi32, #tpu.memory_space<vmem>>, %arg7: memref<1x8x42xf32, #tpu.memory_space<vmem>>, %arg8: memref<1x8x8xf32, #tpu.memory_space<vmem>>) attributes {dimension_semantics = [#tpu.dimension_semantics<parallel>, #tpu.dimension_semantics<parallel>], iteration_bounds = array<i64: 2, 1>, scalar_prefetch = 0 : i64, scratch_operands = 0 : i64, tpu.core_type = #tpu.core_type<tc>, window_params = [{pipeline_mode = #tpu.pipeline_mode<synchronous>, transform_indices = @transform_0, window_bounds = array<i64: 4, 4, 16, 20>}, {pipeline_mode = #tpu.pipeline_mode<synchronous>, transform_indices = @transform_1, window_bounds = array<i64: 1, 20>}, {pipeline_mode = #tpu.pipeline_mode<synchronous>, transform_indices = @transform_2, window_bounds = array<i64: 48, 42>}, {transform_indices = @transform_3, window_bounds = array<i64: 1, 1, 8>}, {transform_indices = @transform_4, window_bounds = array<i64: 1, 1, 8>}, {transform_indices = @transform_5, window_bounds = array<i64: 1, 8, 42>}, {transform_indices = @transform_6, window_bounds = array<i64: 1, 8, 8>}]} {
    %c0 = arith.constant 0 : index
    %c0_0 = arith.constant 0 : index
    %c0_1 = arith.constant 0 : index
    %0 = vector.load %arg5[%c0, %c0_0, %c0_1] : memref<1x1x8xi32, #tpu.memory_space<vmem>>, vector<1x1x8xi32>
    %1 = vector.shape_cast %0 : vector<1x1x8xi32> to vector<1x8xi32>
    %c0_2 = arith.constant 0 : index
    %c0_3 = arith.constant 0 : index
    %c0_4 = arith.constant 0 : index
    %2 = vector.load %arg6[%c0_2, %c0_3, %c0_4] : memref<1x1x8xi32, #tpu.memory_space<vmem>>, vector<1x1x8xi32>
    %3 = vector.shape_cast %2 : vector<1x1x8xi32> to vector<1x8xi32>
    %c0_5 = arith.constant 0 : index
    %c0_6 = arith.constant 0 : index
    %c0_7 = arith.constant 0 : index
    %4 = vector.load %arg7[%c0_5, %c0_6, %c0_7] : memref<1x8x42xf32, #tpu.memory_space<vmem>>, vector<1x8x42xf32>
    %5 = vector.shape_cast %4 : vector<1x8x42xf32> to vector<8x42xf32>
    %6 = arith.truncf %5 : vector<8x42xf32> to vector<8x42xbf16>
    %7 = arith.extf %6 : vector<8x42xbf16> to vector<8x42xf32>
    %8 = arith.subf %5, %7 : vector<8x42xf32>
    %c0_8 = arith.constant 0 : index
    %c0_9 = arith.constant 0 : index
    %9 = vector.load %arg4[%c0_8, %c0_9] : memref<48x42xf32, #tpu.memory_space<vmem>>, vector<48x42xf32>
    %10 = arith.truncf %9 : vector<48x42xf32> to vector<48x42xbf16>
    %cst = arith.constant dense<0.000000e+00> : vector<48x8xf32>
    %11 = tpu.matmul %10, %6, %cst {dimension_numbers = #tpu.dot_dimension_numbers<[1], [1], [0], [0], [0, 0, 1, 0], [], []>} : vector<48x42xbf16>, vector<8x42xbf16>, vector<48x8xf32> -> vector<48x8xf32>
    %c0_10 = arith.constant 0 : index
    %c0_11 = arith.constant 0 : index
    %12 = vector.load %arg4[%c0_10, %c0_11] : memref<48x42xf32, #tpu.memory_space<vmem>>, vector<48x42xf32>
    %cst_12 = arith.constant dense<0.000000e+00> : vector<48x8xf32>
    %13 = tpu.matmul %12, %8, %cst_12 {dimension_numbers = #tpu.dot_dimension_numbers<[1], [1], [0], [0], [0, 0, 1, 0], [], []>} : vector<48x42xf32>, vector<8x42xf32>, vector<48x8xf32> -> vector<48x8xf32>
    %14 = arith.addf %11, %13 : vector<48x8xf32>
    %15 = vector.extract_strided_slice %14 {offsets = [0, 0], sizes = [16, 8], strides = [1, 1]} : vector<48x8xf32> to vector<16x8xf32>
    %16 = vector.shape_cast %15 : vector<16x8xf32> to vector<1x16x8xf32>
    %17 = vector.extract_strided_slice %14 {offsets = [16, 0], sizes = [16, 8], strides = [1, 1]} : vector<48x8xf32> to vector<16x8xf32>
    %18 = vector.shape_cast %17 : vector<16x8xf32> to vector<1x16x8xf32>
    %19 = vector.extract_strided_slice %14 {offsets = [32, 0], sizes = [16, 8], strides = [1, 1]} : vector<48x8xf32> to vector<16x8xf32>
    %20 = vector.shape_cast %19 : vector<16x8xf32> to vector<1x16x8xf32>
    %21 = tpu.iota {dimensions = array<i32: 0>} : vector<20x8xi32>
    %22 = vector.shape_cast %1 : vector<1x8xi32> to vector<1x8xi32>
    %23 = vector.broadcast %22 : vector<1x8xi32> to vector<20x8xi32>
    %24 = arith.cmpi eq, %21, %23 : vector<20x8xi32>
    %25 = arith.extui %24 : vector<20x8xi1> to vector<20x8xi32>
    %26 = arith.sitofp %25 : vector<20x8xi32> to vector<20x8xf32>
    %27 = arith.truncf %26 : vector<20x8xf32> to vector<20x8xbf16>
    %28 = vector.shape_cast %27 : vector<20x8xbf16> to vector<1x20x8xbf16>
    %29 = vector.shape_cast %28 : vector<1x20x8xbf16> to vector<1x20x8xbf16>
    %30 = vector.broadcast %29 : vector<1x20x8xbf16> to vector<4x20x8xbf16>
    %c0_13 = arith.constant 0 : index
    %c0_14 = arith.constant 0 : index
    %31 = vector.load %arg3[%c0_13, %c0_14] : memref<1x20xbf16, #tpu.memory_space<vmem>>, vector<1x20xbf16>
    %cst_15 = arith.constant dense<0.000000e+00> : vector<1x8xf32>
    %32 = tpu.matmul %31, %27, %cst_15 {dimension_numbers = #tpu.dot_dimension_numbers<[1], [0], [0], [1], [0, 0, 1, 1], [], []>} : vector<1x20xbf16>, vector<20x8xbf16>, vector<1x8xf32> -> vector<1x8xf32>
    %c0_16 = arith.constant 0 : index
    %c0_17 = arith.constant 0 : index
    %c0_18 = arith.constant 0 : index
    %c0_19 = arith.constant 0 : index
    %33 = vector.load %arg2[%c0_16, %c0_17, %c0_18, %c0_19] : memref<4x4x16x20xbf16, #tpu.memory_space<vmem>>, vector<1x4x16x20xbf16>
    %34 = vector.shape_cast %33 : vector<1x4x16x20xbf16> to vector<4x16x20xbf16>
    %cst_20 = arith.constant dense<0.000000e+00> : vector<4x16x8xf32>
    %35 = tpu.matmul %34, %30, %cst_20 {dimension_numbers = #tpu.dot_dimension_numbers<[2], [1], [1], [2], [0, 0, 0, 1, 1, 2], [0], [0]>} : vector<4x16x20xbf16>, vector<4x20x8xbf16>, vector<4x16x8xf32> -> vector<4x16x8xf32>
    %36 = vector.broadcast %16 : vector<1x16x8xf32> to vector<4x16x8xf32>
    %37 = arith.mulf %35, %36 : vector<4x16x8xf32>
    %cst_21 = arith.constant dense<0.000000e+00> : vector<4x8xf32>
    %38 = vector.multi_reduction <add>, %37, %cst_21 [1] : vector<4x16x8xf32> to vector<4x8xf32>
    %39 = vector.broadcast %18 : vector<1x16x8xf32> to vector<4x16x8xf32>
    %40 = arith.mulf %35, %39 : vector<4x16x8xf32>
    %cst_22 = arith.constant dense<0.000000e+00> : vector<4x8xf32>
    %41 = vector.multi_reduction <add>, %40, %cst_22 [1] : vector<4x16x8xf32> to vector<4x8xf32>
    %42 = vector.broadcast %20 : vector<1x16x8xf32> to vector<4x16x8xf32>
    %43 = arith.mulf %35, %42 : vector<4x16x8xf32>
    %cst_23 = arith.constant dense<0.000000e+00> : vector<4x8xf32>
    %44 = vector.multi_reduction <add>, %43, %cst_23 [1] : vector<4x16x8xf32> to vector<4x8xf32>
    %c1 = arith.constant 1 : index
    %c0_24 = arith.constant 0 : index
    %c0_25 = arith.constant 0 : index
    %c0_26 = arith.constant 0 : index
    %45 = vector.load %arg2[%c1, %c0_24, %c0_25, %c0_26] : memref<4x4x16x20xbf16, #tpu.memory_space<vmem>>, vector<1x4x16x20xbf16>
    %46 = vector.shape_cast %45 : vector<1x4x16x20xbf16> to vector<4x16x20xbf16>
    %cst_27 = arith.constant dense<0.000000e+00> : vector<4x16x8xf32>
    %47 = tpu.matmul %46, %30, %cst_27 {dimension_numbers = #tpu.dot_dimension_numbers<[2], [1], [1], [2], [0, 0, 0, 1, 1, 2], [0], [0]>} : vector<4x16x20xbf16>, vector<4x20x8xbf16>, vector<4x16x8xf32> -> vector<4x16x8xf32>
    %48 = vector.broadcast %16 : vector<1x16x8xf32> to vector<4x16x8xf32>
    %49 = arith.mulf %47, %48 : vector<4x16x8xf32>
    %cst_28 = arith.constant dense<0.000000e+00> : vector<4x8xf32>
    %50 = vector.multi_reduction <add>, %49, %cst_28 [1] : vector<4x16x8xf32> to vector<4x8xf32>
    %51 = vector.broadcast %18 : vector<1x16x8xf32> to vector<4x16x8xf32>
    %52 = arith.mulf %47, %51 : vector<4x16x8xf32>
    %cst_29 = arith.constant dense<0.000000e+00> : vector<4x8xf32>
    %53 = vector.multi_reduction <add>, %52, %cst_29 [1] : vector<4x16x8xf32> to vector<4x8xf32>
    %54 = vector.broadcast %20 : vector<1x16x8xf32> to vector<4x16x8xf32>
    %55 = arith.mulf %47, %54 : vector<4x16x8xf32>
    %cst_30 = arith.constant dense<0.000000e+00> : vector<4x8xf32>
    %56 = vector.multi_reduction <add>, %55, %cst_30 [1] : vector<4x16x8xf32> to vector<4x8xf32>
    %c2 = arith.constant 2 : index
    %c0_31 = arith.constant 0 : index
    %c0_32 = arith.constant 0 : index
    %c0_33 = arith.constant 0 : index
    %57 = vector.load %arg2[%c2, %c0_31, %c0_32, %c0_33] : memref<4x4x16x20xbf16, #tpu.memory_space<vmem>>, vector<1x4x16x20xbf16>
    %58 = vector.shape_cast %57 : vector<1x4x16x20xbf16> to vector<4x16x20xbf16>
    %cst_34 = arith.constant dense<0.000000e+00> : vector<4x16x8xf32>
    %59 = tpu.matmul %58, %30, %cst_34 {dimension_numbers = #tpu.dot_dimension_numbers<[2], [1], [1], [2], [0, 0, 0, 1, 1, 2], [0], [0]>} : vector<4x16x20xbf16>, vector<4x20x8xbf16>, vector<4x16x8xf32> -> vector<4x16x8xf32>
    %60 = vector.broadcast %16 : vector<1x16x8xf32> to vector<4x16x8xf32>
    %61 = arith.mulf %59, %60 : vector<4x16x8xf32>
    %cst_35 = arith.constant dense<0.000000e+00> : vector<4x8xf32>
    %62 = vector.multi_reduction <add>, %61, %cst_35 [1] : vector<4x16x8xf32> to vector<4x8xf32>
    %63 = vector.broadcast %18 : vector<1x16x8xf32> to vector<4x16x8xf32>
    %64 = arith.mulf %59, %63 : vector<4x16x8xf32>
    %cst_36 = arith.constant dense<0.000000e+00> : vector<4x8xf32>
    %65 = vector.multi_reduction <add>, %64, %cst_36 [1] : vector<4x16x8xf32> to vector<4x8xf32>
    %66 = vector.broadcast %20 : vector<1x16x8xf32> to vector<4x16x8xf32>
    %67 = arith.mulf %59, %66 : vector<4x16x8xf32>
    %cst_37 = arith.constant dense<0.000000e+00> : vector<4x8xf32>
    %68 = vector.multi_reduction <add>, %67, %cst_37 [1] : vector<4x16x8xf32> to vector<4x8xf32>
    %c3 = arith.constant 3 : index
    %c0_38 = arith.constant 0 : index
    %c0_39 = arith.constant 0 : index
    %c0_40 = arith.constant 0 : index
    %69 = vector.load %arg2[%c3, %c0_38, %c0_39, %c0_40] : memref<4x4x16x20xbf16, #tpu.memory_space<vmem>>, vector<1x4x16x20xbf16>
    %70 = vector.shape_cast %69 : vector<1x4x16x20xbf16> to vector<4x16x20xbf16>
    %cst_41 = arith.constant dense<0.000000e+00> : vector<4x16x8xf32>
    %71 = tpu.matmul %70, %30, %cst_41 {dimension_numbers = #tpu.dot_dimension_numbers<[2], [1], [1], [2], [0, 0, 0, 1, 1, 2], [0], [0]>} : vector<4x16x20xbf16>, vector<4x20x8xbf16>, vector<4x16x8xf32> -> vector<4x16x8xf32>
    %72 = vector.broadcast %16 : vector<1x16x8xf32> to vector<4x16x8xf32>
    %73 = arith.mulf %71, %72 : vector<4x16x8xf32>
    %cst_42 = arith.constant dense<0.000000e+00> : vector<4x8xf32>
    %74 = vector.multi_reduction <add>, %73, %cst_42 [1] : vector<4x16x8xf32> to vector<4x8xf32>
    %75 = vector.broadcast %18 : vector<1x16x8xf32> to vector<4x16x8xf32>
    %76 = arith.mulf %71, %75 : vector<4x16x8xf32>
    %cst_43 = arith.constant dense<0.000000e+00> : vector<4x8xf32>
    %77 = vector.multi_reduction <add>, %76, %cst_43 [1] : vector<4x16x8xf32> to vector<4x8xf32>
    %78 = vector.broadcast %20 : vector<1x16x8xf32> to vector<4x16x8xf32>
    %79 = arith.mulf %71, %78 : vector<4x16x8xf32>
    %cst_44 = arith.constant dense<0.000000e+00> : vector<4x8xf32>
    %80 = vector.multi_reduction <add>, %79, %cst_44 [1] : vector<4x16x8xf32> to vector<4x8xf32>
    %81 = arith.subf %50, %38 : vector<4x8xf32>
    %82 = arith.subf %53, %41 : vector<4x8xf32>
    %83 = arith.subf %56, %44 : vector<4x8xf32>
    %84 = arith.mulf %81, %81 : vector<4x8xf32>
    %85 = arith.mulf %82, %82 : vector<4x8xf32>
    %86 = arith.addf %84, %85 : vector<4x8xf32>
    %87 = arith.mulf %83, %83 : vector<4x8xf32>
    %88 = arith.addf %86, %87 : vector<4x8xf32>
    %cst_45 = arith.constant 9.99999997E-7 : f32
    %89 = vector.broadcast %cst_45 : f32 to vector<4x8xf32>
    %90 = arith.addf %88, %89 : vector<4x8xf32>
    %91 = math.rsqrt %90 : vector<4x8xf32>
    %92 = arith.mulf %81, %91 : vector<4x8xf32>
    %93 = arith.mulf %82, %91 : vector<4x8xf32>
    %94 = arith.mulf %83, %91 : vector<4x8xf32>
    %95 = arith.subf %62, %50 : vector<4x8xf32>
    %96 = arith.subf %65, %53 : vector<4x8xf32>
    %97 = arith.subf %68, %56 : vector<4x8xf32>
    %98 = arith.mulf %95, %95 : vector<4x8xf32>
    %99 = arith.mulf %96, %96 : vector<4x8xf32>
    %100 = arith.addf %98, %99 : vector<4x8xf32>
    %101 = arith.mulf %97, %97 : vector<4x8xf32>
    %102 = arith.addf %100, %101 : vector<4x8xf32>
    %cst_46 = arith.constant 9.99999997E-7 : f32
    %103 = vector.broadcast %cst_46 : f32 to vector<4x8xf32>
    %104 = arith.addf %102, %103 : vector<4x8xf32>
    %105 = math.rsqrt %104 : vector<4x8xf32>
    %106 = arith.mulf %95, %105 : vector<4x8xf32>
    %107 = arith.mulf %96, %105 : vector<4x8xf32>
    %108 = arith.mulf %97, %105 : vector<4x8xf32>
    %109 = arith.subf %74, %62 : vector<4x8xf32>
    %110 = arith.subf %77, %65 : vector<4x8xf32>
    %111 = arith.subf %80, %68 : vector<4x8xf32>
    %112 = arith.mulf %109, %109 : vector<4x8xf32>
    %113 = arith.mulf %110, %110 : vector<4x8xf32>
    %114 = arith.addf %112, %113 : vector<4x8xf32>
    %115 = arith.mulf %111, %111 : vector<4x8xf32>
    %116 = arith.addf %114, %115 : vector<4x8xf32>
    %cst_47 = arith.constant 9.99999997E-7 : f32
    %117 = vector.broadcast %cst_47 : f32 to vector<4x8xf32>
    %118 = arith.addf %116, %117 : vector<4x8xf32>
    %119 = math.rsqrt %118 : vector<4x8xf32>
    %120 = arith.mulf %109, %119 : vector<4x8xf32>
    %121 = arith.mulf %110, %119 : vector<4x8xf32>
    %122 = arith.mulf %111, %119 : vector<4x8xf32>
    %123 = arith.mulf %93, %108 : vector<4x8xf32>
    %124 = arith.mulf %94, %107 : vector<4x8xf32>
    %125 = arith.subf %123, %124 : vector<4x8xf32>
    %126 = arith.mulf %94, %106 : vector<4x8xf32>
    %127 = arith.mulf %92, %108 : vector<4x8xf32>
    %128 = arith.subf %126, %127 : vector<4x8xf32>
    %129 = arith.mulf %92, %107 : vector<4x8xf32>
    %130 = arith.mulf %93, %106 : vector<4x8xf32>
    %131 = arith.subf %129, %130 : vector<4x8xf32>
    %132 = arith.mulf %125, %125 : vector<4x8xf32>
    %133 = arith.mulf %128, %128 : vector<4x8xf32>
    %134 = arith.addf %132, %133 : vector<4x8xf32>
    %135 = arith.mulf %131, %131 : vector<4x8xf32>
    %136 = arith.addf %134, %135 : vector<4x8xf32>
    %cst_48 = arith.constant 9.99999997E-7 : f32
    %137 = vector.broadcast %cst_48 : f32 to vector<4x8xf32>
    %138 = arith.addf %136, %137 : vector<4x8xf32>
    %139 = math.rsqrt %138 : vector<4x8xf32>
    %140 = arith.mulf %125, %139 : vector<4x8xf32>
    %141 = arith.mulf %128, %139 : vector<4x8xf32>
    %142 = arith.mulf %131, %139 : vector<4x8xf32>
    %143 = arith.mulf %107, %122 : vector<4x8xf32>
    %144 = arith.mulf %108, %121 : vector<4x8xf32>
    %145 = arith.subf %143, %144 : vector<4x8xf32>
    %146 = arith.mulf %108, %120 : vector<4x8xf32>
    %147 = arith.mulf %106, %122 : vector<4x8xf32>
    %148 = arith.subf %146, %147 : vector<4x8xf32>
    %149 = arith.mulf %106, %121 : vector<4x8xf32>
    %150 = arith.mulf %107, %120 : vector<4x8xf32>
    %151 = arith.subf %149, %150 : vector<4x8xf32>
    %152 = arith.mulf %145, %145 : vector<4x8xf32>
    %153 = arith.mulf %148, %148 : vector<4x8xf32>
    %154 = arith.addf %152, %153 : vector<4x8xf32>
    %155 = arith.mulf %151, %151 : vector<4x8xf32>
    %156 = arith.addf %154, %155 : vector<4x8xf32>
    %cst_49 = arith.constant 9.99999997E-7 : f32
    %157 = vector.broadcast %cst_49 : f32 to vector<4x8xf32>
    %158 = arith.addf %156, %157 : vector<4x8xf32>
    %159 = math.rsqrt %158 : vector<4x8xf32>
    %160 = arith.mulf %145, %159 : vector<4x8xf32>
    %161 = arith.mulf %148, %159 : vector<4x8xf32>
    %162 = arith.mulf %151, %159 : vector<4x8xf32>
    %163 = arith.mulf %140, %160 : vector<4x8xf32>
    %164 = arith.mulf %141, %161 : vector<4x8xf32>
    %165 = arith.addf %163, %164 : vector<4x8xf32>
    %166 = arith.mulf %142, %162 : vector<4x8xf32>
    %167 = arith.addf %165, %166 : vector<4x8xf32>
    %168 = arith.mulf %141, %162 : vector<4x8xf32>
    %169 = arith.mulf %142, %161 : vector<4x8xf32>
    %170 = arith.subf %168, %169 : vector<4x8xf32>
    %171 = arith.mulf %142, %160 : vector<4x8xf32>
    %172 = arith.mulf %140, %162 : vector<4x8xf32>
    %173 = arith.subf %171, %172 : vector<4x8xf32>
    %174 = arith.mulf %140, %161 : vector<4x8xf32>
    %175 = arith.mulf %141, %160 : vector<4x8xf32>
    %176 = arith.subf %174, %175 : vector<4x8xf32>
    %177 = arith.mulf %170, %106 : vector<4x8xf32>
    %178 = arith.mulf %173, %107 : vector<4x8xf32>
    %179 = arith.addf %177, %178 : vector<4x8xf32>
    %180 = arith.mulf %176, %108 : vector<4x8xf32>
    %181 = arith.addf %179, %180 : vector<4x8xf32>
    %182 = math.atan2 %181, %167 : vector<4x8xf32>
    %183 = vector.shape_cast %3 : vector<1x8xi32> to vector<1x8xi32>
    %184 = vector.broadcast %183 : vector<1x8xi32> to vector<4x8xi32>
    %c0_i32 = arith.constant 0 : i32
    %185 = vector.broadcast %c0_i32 : i32 to vector<4x8xi32>
    %186 = arith.cmpi sgt, %184, %185 : vector<4x8xi32>
    %187 = vector.shape_cast %32 : vector<1x8xf32> to vector<1x8xf32>
    %188 = vector.broadcast %187 : vector<1x8xf32> to vector<4x8xf32>
    %cst_50 = arith.constant 0.000000e+00 : f32
    %189 = vector.broadcast %cst_50 : f32 to vector<4x8xf32>
    %190 = arith.select %186, %188, %189 : vector<4x8xi1>, vector<4x8xf32>
    %191 = tpu.iota {dimensions = array<i32: 0>} : vector<4x8xi32>
    %192 = arith.sitofp %191 : vector<4x8xi32> to vector<4x8xf32>
    %193 = arith.cmpf olt, %192, %190 : vector<4x8xf32>
    %194 = arith.extui %193 : vector<4x8xi1> to vector<4x8xi32>
    %195 = arith.sitofp %194 : vector<4x8xi32> to vector<4x8xf32>
    %196 = arith.mulf %182, %195 : vector<4x8xf32>
    %197 = tpu.concatenate %196, %195 in 0 : vector<4x8xf32>, vector<4x8xf32> -> vector<8x8xf32>
    %c0_51 = arith.constant 0 : index
    %c0_52 = arith.constant 0 : index
    %c0_53 = arith.constant 0 : index
    %198 = vector.load %arg8[%c0_51, %c0_52, %c0_53] : memref<1x8x8xf32, #tpu.memory_space<vmem>>, vector<1x8x8xf32>
    %199 = vector.shape_cast %198 : vector<1x8x8xf32> to vector<8x8xf32>
    %200 = vector.shape_cast %197 : vector<8x8xf32> to vector<1x8x8xf32>
    tpu.vector_store %arg8[%c0_51, %c0_52, %c0_53], %200 {strides = array<i32>} : memref<1x8x8xf32, #tpu.memory_space<vmem>>, vector<1x8x8xf32>,
    return
  }
  func.func @transform_0(%arg0: i32, %arg1: i32) -> (i32, i32, i32, i32) {
    %c0_i32 = arith.constant 0 : i32
    %c0_i32_0 = arith.constant 0 : i32
    %c0_i32_1 = arith.constant 0 : i32
    %c0_i32_2 = arith.constant 0 : i32
    %c0_i32_3 = arith.constant 0 : i32
    return %c0_i32, %c0_i32_0, %c0_i32_1, %c0_i32_2 : i32, i32, i32, i32
  }
  func.func @transform_1(%arg0: i32, %arg1: i32) -> (i32, i32) {
    %c0_i32 = arith.constant 0 : i32
    %c0_i32_0 = arith.constant 0 : i32
    %c0_i32_1 = arith.constant 0 : i32
    return %c0_i32, %c0_i32_0 : i32, i32
  }
  func.func @transform_2(%arg0: i32, %arg1: i32) -> (i32, i32) {
    %c0_i32 = arith.constant 0 : i32
    %c0_i32_0 = arith.constant 0 : i32
    %c0_i32_1 = arith.constant 0 : i32
    return %c0_i32, %c0_i32_0 : i32, i32
  }
  func.func @transform_3(%arg0: i32, %arg1: i32) -> (i32, i32, i32) {
    %c0_i32 = arith.constant 0 : i32
    %c0_i32_0 = arith.constant 0 : i32
    return %arg0, %c0_i32, %arg1 : i32, i32, i32
  }
  func.func @transform_4(%arg0: i32, %arg1: i32) -> (i32, i32, i32) {
    %c0_i32 = arith.constant 0 : i32
    %c0_i32_0 = arith.constant 0 : i32
    return %arg0, %c0_i32, %arg1 : i32, i32, i32
  }
  func.func @transform_5(%arg0: i32, %arg1: i32) -> (i32, i32, i32) {
    %c0_i32 = arith.constant 0 : i32
    %c0_i32_0 = arith.constant 0 : i32
    return %arg0, %arg1, %c0_i32 : i32, i32, i32
  }
  func.func @transform_6(%arg0: i32, %arg1: i32) -> (i32, i32, i32) {
    %c0_i32 = arith.constant 0 : i32
    %c0_i32_0 = arith.constant 0 : i32
    return %arg0, %c0_i32, %arg1 : i32, i32, i32
  }
}

</mosaic_0001>

<llo_original>
// kernel: chi_angles.1
$region0: #{chi_angles.1}
  #allocation0 [shape = 'u32[]', space=smem, size = 0x4, offset = 0x4, fixed_abs, tag = 'smem constant byte address 0x4 - core index']
  #allocation1 [shape = 'u32[144,128]{1,0:T(1,128)}', space=vmem, size = 0x12000, scoped, tag = 'internal scratch']
  %s0 = inlined_call_operand.vmem [shape: bf16[4,4,16,20], index: 0, kind: input, shape index: {}]
  %s1 = inlined_call_operand.vmem [shape: bf16[1,20], index: 1, kind: input, shape index: {}]
  %s2 = inlined_call_operand.vmem [shape: f32[48,42], index: 2, kind: input, shape index: {}]
  %s3 = inlined_call_operand.vmem [shape: s32[2,1,8], index: 3, kind: input, shape index: {}]
  %s4 = inlined_call_operand.vmem [shape: s32[2,1,8], index: 4, kind: input, shape index: {}]
  %s5 = inlined_call_operand.vmem [shape: f32[2,8,42], index: 5, kind: input, shape index: {}]
  %s6 = inlined_call_operand.vmem [shape: f32[2,8,8], index: 6, kind: output, shape index: {}]
  %s7 = sld [smem:[#allocation0]]
  $region57: #{chi_angles.1} parent=0
    _
  %s9 = ssub.s32 1, %s7
  %s10 = scalar_select 0, %s9, %s7
  loop: start=0, step=1, limit=4
  $region2: #{chi_angles.1} parent=0 // loop_pre_header
    _
  $region3: #{chi_angles.1} parent=0 // loop_header
    %s12 = sphi 0, %s16
    %p13 = scmp.ge.s32.totalorder %s12, 4
    %s19 = sphi 0, %s31
    %s20 = sphi 0, %s27
    %s21 = sphi 0, %s19
    %s22 = sphi 0, %s20
    %s23 = sphi 0, %s21
    %s24 = sphi 0, %s22
    %s32 = sphi 0, %s32
    %s34 = sphi 0, %s32
    %s35 = sphi 0, %s34
    %s49 = sphi 0, %s35
    %s53 = sphi 0, %s53
    %s55 = sphi 0, %s53
    %s56 = sphi 0, %s55
    %s70 = sphi 0, %s56
    %s74 = sphi 0, %s74
    %s76 = sphi 0, %s74
    %s77 = sphi 0, %s76
    %s91 = sphi 0, %s77
    %s99 = sphi 0, %s101
    %s102 = sphi 0, %s99
    %s103 = sphi 0, %s102
    %s119 = sphi 0, %s103
    %s127 = sphi 0, %s129
    %s130 = sphi 0, %s127
    %s131 = sphi 0, %s130
    %s147 = sphi 0, %s131
    %s155 = sphi 0, %s157
    %s158 = sphi 0, %s155
    %s159 = sphi 0, %s158
    %s175 = sphi 0, %s159
    %s183 = sphi 0, %s185
    %s186 = sphi 0, %s183
    %s187 = sphi 0, %s186
    %s203 = sphi 0, %s187
  $region4: #{chi_angles.1} parent=0 // loop_header_branch
    %15 = sbr.rel (%p13) target = $region8
  $region5: #{chi_angles.1} parent=0 // loop_body
    %s17 = ssub.s32 %s12, 1
    %s18 = ssub.s32 %s12, 2
    %s25 = sadd.s32 1, %s20
    %p26 = scmp.ge.s32.totalorder %s25, 1
    %s27 = scalar_select %p26, 0, %s25
    %s28 = sadd.s32 1, %s19
    %s29 = scalar_select %p26, %s28, %s19
    %p30 = scmp.ge.s32.totalorder %s29, 2
    %s31 = scalar_select %p30, 0, %s29
    %s33 = sadd.s32 %s32, 1
    %p36 = scmp.eq.s32.totalorder %s12, 1
    %p37 = scmp.ne.s32.totalorder %s32, %s34
    %p38 = scmp.eq.s32.totalorder %s12, 0
    %p39 = por %p37, %p38
    %p40 = scmp.ne.s32.totalorder %s32, %s34
    %p41 = scmp.eq.s32.totalorder %s17, 1
    %p42 = por %p40, %p41
    %p43 = scmp.ne.s32.totalorder %s34, %s35
    %p44 = scmp.eq.s32.totalorder %s17, 0
    %p45 = por %p43, %p44
    %p46 = scmp.ne.s32.totalorder %s34, %s35
    %p47 = scmp.eq.s32.totalorder %s18, 1
    %p48 = por %p46, %p47
    %p50 = scmp.ne.s32.totalorder %s35, %s49
    %p51 = scmp.eq.s32.totalorder %s18, 0
    %p52 = por %p50, %p51
    %s54 = sadd.s32 %s53, 1
    %p57 = scmp.eq.s32.totalorder %s12, 1
    %p58 = scmp.ne.s32.totalorder %s53, %s55
    %p59 = scmp.eq.s32.totalorder %s12, 0
    %p60 = por %p58, %p59
    %p61 = scmp.ne.s32.totalorder %s53, %s55
    %p62 = scmp.eq.s32.totalorder %s17, 1
    %p63 = por %p61, %p62
    %p64 = scmp.ne.s32.totalorder %s55, %s56
    %p65 = scmp.eq.s32.totalorder %s17, 0
    %p66 = por %p64, %p65
    %p67 = scmp.ne.s32.totalorder %s55, %s56
    %p68 = scmp.eq.s32.totalorder %s18, 1
    %p69 = por %p67, %p68
    %p71 = scmp.ne.s32.totalorder %s56, %s70
    %p72 = scmp.eq.s32.totalorder %s18, 0
    %p73 = por %p71, %p72
    %s75 = sadd.s32 %s74, 1
    %p78 = scmp.eq.s32.totalorder %s12, 1
    %p79 = scmp.ne.s32.totalorder %s74, %s76
    %p80 = scmp.eq.s32.totalorder %s12, 0
    %p81 = por %p79, %p80
    %p82 = scmp.ne.s32.totalorder %s74, %s76
    %p83 = scmp.eq.s32.totalorder %s17, 1
    %p84 = por %p82, %p83
    %p85 = scmp.ne.s32.totalorder %s76, %s77
    %p86 = scmp.eq.s32.totalorder %s17, 0
    %p87 = por %p85, %p86
    %p88 = scmp.ne.s32.totalorder %s76, %s77
    %p89 = scmp.eq.s32.totalorder %s18, 1
    %p90 = por %p88, %p89
    %p92 = scmp.ne.s32.totalorder %s77, %s91
    %p93 = scmp.eq.s32.totalorder %s18, 0
    %p94 = por %p92, %p93
    %s95 = ssub.s32 %s19, %s31
    %s96 = ssub.s32 %s20, %s27
    %s97 = sor.u32 %s95, %s96
    %p98 = scmp.eq.s32.totalorder %s97, 0
    %s100 = sadd.s32 %s99, 1
    %s101 = scalar_select %p98, %s99, %s100
    %p104 = pneg %p98
    %p105 = scmp.eq.s32.totalorder %s12, 1
    %p106 = por %p104, %p105
    %p107 = scmp.ne.s32.totalorder %s99, %s102
    %p108 = scmp.eq.s32.totalorder %s12, 0
    %p109 = por %p107, %p108
    %p110 = scmp.ne.s32.totalorder %s99, %s102
    %p111 = scmp.eq.s32.totalorder %s17, 1
    %p112 = por %p110, %p111
    %p113 = scmp.ne.s32.totalorder %s102, %s103
    %p114 = scmp.eq.s32.totalorder %s17, 0
    %p115 = por %p113, %p114
    %p116 = scmp.ne.s32.totalorder %s102, %s103
    %p117 = scmp.eq.s32.totalorder %s18, 1
    %p118 = por %p116, %p117
    %p120 = scmp.ne.s32.totalorder %s103, %s119
    %p121 = scmp.eq.s32.totalorder %s18, 0
    %p122 = por %p120, %p121
    %s123 = ssub.s32 %s19, %s31
    %s124 = ssub.s32 %s20, %s27
    %s125 = sor.u32 %s123, %s124
    %p126 = scmp.eq.s32.totalorder %s125, 0
    %s128 = sadd.s32 %s127, 1
    %s129 = scalar_select %p126, %s127, %s128
    %p132 = pneg %p126
    %p133 = scmp.eq.s32.totalorder %s12, 1
    %p134 = por %p132, %p133
    %p135 = scmp.ne.s32.totalorder %s127, %s130
    %p136 = scmp.eq.s32.totalorder %s12, 0
    %p137 = por %p135, %p136
    %p138 = scmp.ne.s32.totalorder %s127, %s130
    %p139 = scmp.eq.s32.totalorder %s17, 1
    %p140 = por %p138, %p139
    %p141 = scmp.ne.s32.totalorder %s130, %s131
    %p142 = scmp.eq.s32.totalorder %s17, 0
    %p143 = por %p141, %p142
    %p144 = scmp.ne.s32.totalorder %s130, %s131
    %p145 = scmp.eq.s32.totalorder %s18, 1
    %p146 = por %p144, %p145
    %p148 = scmp.ne.s32.totalorder %s131, %s147
    %p149 = scmp.eq.s32.totalorder %s18, 0
    %p150 = por %p148, %p149
    %s151 = ssub.s32 %s19, %s31
    %s152 = ssub.s32 %s20, %s27
    %s153 = sor.u32 %s151, %s152
    %p154 = scmp.eq.s32.totalorder %s153, 0
    %s156 = sadd.s32 %s155, 1
    %s157 = scalar_select %p154, %s155, %s156
    %p160 = pneg %p154
    %p161 = scmp.eq.s32.totalorder %s12, 1
    %p162 = por %p160, %p161
    %p163 = scmp.ne.s32.totalorder %s155, %s158
    %p164 = scmp.eq.s32.totalorder %s12, 0
    %p165 = por %p163, %p164
    %p166 = scmp.ne.s32.totalorder %s155, %s158
    %p167 = scmp.eq.s32.totalorder %s17, 1
    %p168 = por %p166, %p167
    %p169 = scmp.ne.s32.totalorder %s158, %s159
    %p170 = scmp.eq.s32.totalorder %s17, 0
    %p171 = por %p169, %p170
    %p172 = scmp.ne.s32.totalorder %s158, %s159
    %p173 = scmp.eq.s32.totalorder %s18, 1
    %p174 = por %p172, %p173
    %p176 = scmp.ne.s32.totalorder %s159, %s175
    %p177 = scmp.eq.s32.totalorder %s18, 0
    %p178 = por %p176, %p177
    %s179 = ssub.s32 %s19, %s31
    %s180 = ssub.s32 %s20, %s27
    %s181 = sor.u32 %s179, %s180
    %p182 = scmp.eq.s32.totalorder %s181, 0
    %s184 = sadd.s32 %s183, 1
    %s185 = scalar_select %p182, %s183, %s184
    %p188 = pneg %p182
    %p189 = scmp.eq.s32.totalorder %s12, 1
    %p190 = por %p188, %p189
    %p191 = scmp.ne.s32.totalorder %s183, %s186
    %p192 = scmp.eq.s32.totalorder %s12, 0
    %p193 = por %p191, %p192
    %p194 = scmp.ne.s32.totalorder %s183, %s186
    %p195 = scmp.eq.s32.totalorder %s17, 1
    %p196 = por %p194, %p195
    %p197 = scmp.ne.s32.totalorder %s186, %s187
    %p198 = scmp.eq.s32.totalorder %s17, 0
    %p199 = por %p197, %p198
    %p200 = scmp.ne.s32.totalorder %s186, %s187
    %p201 = scmp.eq.s32.totalorder %s18, 1
    %p202 = por %p200, %p201
    %p204 = scmp.ne.s32.totalorder %s187, %s203
    %p205 = scmp.eq.s32.totalorder %s18, 0
    %p206 = por %p204, %p205
    %p207 = scmp.le.s32.totalorder 1, %s12
    %p208 = scmp.lt.s32.totalorder %s12, 3
    %p209 = pnand %p207, %p208
    %p210 = pneg %p209
    // Predicated region
    $region9: #{chi_angles.1} parent=5 // pred_check
      _
    $region10: #{chi_angles.1} parent=5 // pred_check_branch
      %212 = sbr.rel (%p209) target = $region12
    $region11: #{chi_angles.1} parent=5 // pred_region
      %s213 = ssub.s32 %s12, 1
      // Predicated region
      $region13: #{chi_angles.1} parent=11 // pred_check
        %p214 = pneg %p45
      $region14: #{chi_angles.1} parent=11 // pred_check_branch
        %216 = sbr.rel (%p214) target = $region16
      $region15: #{chi_angles.1} parent=11 // pred_region
        _
      $region16: #{chi_angles.1} parent=11 // pred_fallthru
        _
      // Predicated region
      $region17: #{chi_angles.1} parent=11 // pred_check
        %p217 = pneg %p66
      $region18: #{chi_angles.1} parent=11 // pred_check_branch
        %219 = sbr.rel (%p217) target = $region20
      $region19: #{chi_angles.1} parent=11 // pred_region
        _
      $region20: #{chi_angles.1} parent=11 // pred_fallthru
        _
      // Predicated region
      $region21: #{chi_angles.1} parent=11 // pred_check
        %p220 = pneg %p87
      $region22: #{chi_angles.1} parent=11 // pred_check_branch
        %222 = sbr.rel (%p220) target = $region24
      $region23: #{chi_angles.1} parent=11 // pred_region
        _
      $region24: #{chi_angles.1} parent=11 // pred_fallthru
        _
    $region12: #{chi_angles.1} parent=5 // pred_fallthru
      _
    %p223 = scmp.lt.s32.totalorder %s12, 2
    // Predicated region
    $region25: #{chi_angles.1} parent=5 // pred_check
      %p224 = pneg %p223
    $region26: #{chi_angles.1} parent=5 // pred_check_branch
      %226 = sbr.rel (%p224) target = $region28
    $region27: #{chi_angles.1} parent=5 // pred_region
      // Predicated region
      $region29: #{chi_angles.1} parent=27 // pred_check
        %p227 = pneg %p109
      $region30: #{chi_angles.1} parent=27 // pred_check_branch
        %229 = sbr.rel (%p227) target = $region32
      $region31: #{chi_angles.1} parent=27 // pred_region
        %p230 = scmp.lt.s32.totalorder %s19, 1
        %s231 = scalar_select %p230, %s19, 1
        %p232 = scmp.lt.s32.totalorder %s20, 0
        %s233 = scalar_select %p232, %s20, 0
        %s234 = sadd.s32 %s233, %s231
        %s235 = scalar_lea.vmem %s3, %s234
      $region32: #{chi_angles.1} parent=27 // pred_fallthru
        _
      // Predicated region
      $region33: #{chi_angles.1} parent=27 // pred_check
        %p236 = pneg %p137
      $region34: #{chi_angles.1} parent=27 // pred_check_branch
        %238 = sbr.rel (%p236) target = $region36
      $region35: #{chi_angles.1} parent=27 // pred_region
        %p239 = scmp.lt.s32.totalorder %s19, 1
        %s240 = scalar_select %p239, %s19, 1
        %p241 = scmp.lt.s32.totalorder %s20, 0
        %s242 = scalar_select %p241, %s20, 0
        %s243 = sadd.s32 %s242, %s240
        %s244 = scalar_lea.vmem %s4, %s243
      $region36: #{chi_angles.1} parent=27 // pred_fallthru
        _
      // Predicated region
      $region37: #{chi_angles.1} parent=27 // pred_check
        %p245 = pneg %p165
      $region38: #{chi_angles.1} parent=27 // pred_check_branch
        %247 = sbr.rel (%p245) target = $region40
      $region39: #{chi_angles.1} parent=27 // pred_region
        %p248 = scmp.lt.s32.totalorder %s19, 1
        %s249 = scalar_select %p248, %s19, 1
        %p250 = scmp.lt.s32.totalorder %s20, 0
        %s251 = scalar_select %p250, %s20, 0
        %s252 = sadd.s32 %s251, %s249
        %s253 = smul.addr %s252, 8
        %s254 = scalar_lea.vmem %s5, %s253
      $region40: #{chi_angles.1} parent=27 // pred_fallthru
        _
    $region28: #{chi_angles.1} parent=5 // pred_fallthru
      _
    %p255 = scmp.le.s32.totalorder 1, %s12
    %p256 = scmp.lt.s32.totalorder %s12, 3
    %p257 = pnand %p255, %p256
    %p258 = pneg %p257
    // Predicated region
    $region41: #{chi_angles.1} parent=5 // pred_check
      _
    $region42: #{chi_angles.1} parent=5 // pred_check_branch
      %260 = sbr.rel (%p257) target = $region44
    $region43: #{chi_angles.1} parent=5 // pred_region
      %s261 = ssub.s32 %s12, 1
      %p262 = pneg %p45
      %p263 = pneg %p42
      %p264 = pneg %p66
      %p265 = pneg %p63
      %p266 = pneg %p87
      %p267 = pneg %p84
      %p268 = scmp.lt.s32.totalorder %s21, 1
      %s269 = scalar_select %p268, %s21, 1
      %p270 = scmp.lt.s32.totalorder %s22, 0
      %s271 = scalar_select %p270, %s22, 0
      %s272 = sadd.s32 %s271, %s269
      %s273 = scalar_lea.vmem %s3, %s272
      %p274 = pneg %p115
      %p275 = pneg %p112
      %p276 = scmp.lt.s32.totalorder %s21, 1
      %s277 = scalar_select %p276, %s21, 1
      %p278 = scmp.lt.s32.totalorder %s22, 0
      %s279 = scalar_select %p278, %s22, 0
      %s280 = sadd.s32 %s279, %s277
      %s281 = scalar_lea.vmem %s4, %s280
      %p282 = pneg %p143
      %p283 = pneg %p140
      %p284 = scmp.lt.s32.totalorder %s21, 1
      %s285 = scalar_select %p284, %s21, 1
      %p286 = scmp.lt.s32.totalorder %s22, 0
      %s287 = scalar_select %p286, %s22, 0
      %s288 = sadd.s32 %s287, %s285
      %s289 = smul.addr %s288, 8
      %s290 = scalar_lea.vmem %s5, %s289
      %p291 = pneg %p171
      %p292 = pneg %p168
      %p293 = pneg %p199
      %p294 = pneg %p196
      %p295 = scmp.lt.s32.totalorder %s21, 1
      %s296 = scalar_select %p295, %s21, 1
      %p297 = scmp.lt.s32.totalorder %s22, 0
      %s298 = scalar_select %p297, %s22, 0
      %s299 = sadd.s32 %s298, %s296
      %s300 = smul.addr %s299, 8
      %s301 = scalar_lea.vmem %s6, %s300
      %p302 = scmp.lt.s32.totalorder %s21, 1
      %s303 = scalar_select %p302, %s21, 1
      %p304 = scmp.lt.s32.totalorder %s22, 0
      %s305 = scalar_select %p304, %s22, 0
      %s306 = sadd.s32 %s305, %s303
      %s307 = scalar_lea.vmem %s3, %s306
      %p308 = scmp.lt.s32.totalorder %s21, 1
      %s309 = scalar_select %p308, %s21, 1
      %p310 = scmp.lt.s32.totalorder %s22, 0
      %s311 = scalar_select %p310, %s22, 0
      %s312 = sadd.s32 %s311, %s309
      %s313 = scalar_lea.vmem %s4, %s312
      %p314 = scmp.lt.s32.totalorder %s21, 1
      %s315 = scalar_select %p314, %s21, 1
      %p316 = scmp.lt.s32.totalorder %s22, 0
      %s317 = scalar_select %p316, %s22, 0
      %s318 = sadd.s32 %s317, %s315
      %s319 = smul.addr %s318, 8
      %s320 = scalar_lea.vmem %s5, %s319
      %p321 = scmp.lt.s32.totalorder %s21, 1
      %s322 = scalar_select %p321, %s21, 1
      %p323 = scmp.lt.s32.totalorder %s22, 0
      %s324 = scalar_select %p323, %s22, 0
      %s325 = sadd.s32 %s324, %s322
      %s326 = smul.addr %s325, 8
      %s327 = scalar_lea.vmem %s6, %s326
      %v329 = vld [vmem:[%s307] sm:$0x1]
      %v330 = vld [vmem:[%s313] sm:$0x1]
      %v331 = vld [vmem:[%s320] sm:$0xff]
      %v332 = vpack.c.bf16 %v331, %v331
      %v333 = vunpack.c.l.bf16 %v332
      %v334 = vsub.f32 %v331, %v333
      %v335 = vld [vmem:[%s2] sm:$0xff]
      %v336 = vld [vmem:[%s2 + $0x8] sm:$0xff]
      %v337 = vld [vmem:[%s2 + $0x10] sm:$0xff]
      %v338 = vld [vmem:[%s2 + $0x18] sm:$0xff]
      %v339 = vld [vmem:[%s2 + $0x20] sm:$0xff]
      %v340 = vld [vmem:[%s2 + $0x28] sm:$0xff]
      %v341 = vpack.c.bf16 %v336, %v335
      %v342 = vpack.c.bf16 %v338, %v337
      %v343 = vpack.c.bf16 %v340, %v339
      %vm344 = vcmask 343040
      %v346 = vsel %vm344, %v335, 0
      %v349 = vsel %vm344, %v336, 0
      %v352 = vsel %vm344, %v337, 0
      %v355 = vsel %vm344, %v338, 0
      %v358 = vsel %vm344, %v339, 0
      %v361 = vsel %vm344, %v340, 0
      %v364 = vsel %vm344, %v334, 0
      %366 = vmatprep.subr.mxu0 0.0
      %367 = vmatpush1.xpose.msra.mxu0 %v364
      %368 = vmatprep.subr.mxu0 0.0
      %369 = vmatpush1.xpose.msra.mxu0 0.0
      %370 = vmatprep.subr.mxu0 0.0
      %371 = vmatpush1.xpose.msra.mxu0 0.0
      %372 = vmatprep.subr.mxu0 0.0
      %373 = vmatpush1.xpose.msra.mxu0 0.0
      %374 = vmatprep.subr.mxu0 0.0
      %375 = vmatpush1.xpose.msra.mxu0 0.0
      %376 = vmatprep.subr.mxu0 0.0
      %377 = vmatpush1.xpose.msra.mxu0 0.0
      %378 = vmatprep.subr.mxu0 0.0
      %379 = vmatpush1.xpose.msra.mxu0 0.0
      %380 = vmatprep.subr.mxu0 0.0
      %381 = vmatpush1.xpose.msra.mxu0 0.0
      %382 = vmatprep.subr.mxu0 0.0
      %383 = vmatpush1.xpose.msra.mxu0 0.0
      %384 = vmatprep.subr.mxu0 0.0
      %385 = vmatpush1.xpose.msra.mxu0 0.0
      %386 = vmatprep.subr.mxu0 0.0
      %387 = vmatpush1.xpose.msra.mxu0 0.0
      %388 = vmatprep.subr.mxu0 0.0
      %389 = vmatpush1.xpose.msra.mxu0 0.0
      %390 = vmatprep.subr.mxu0 0.0
      %391 = vmatpush1.xpose.msra.mxu0 0.0
      %392 = vmatprep.subr.mxu0 0.0
      %393 = vmatpush1.xpose.msra.mxu0 0.0
      %394 = vmatprep.subr.mxu0 0.0
      %395 = vmatpush1.xpose.msra.mxu0 0.0
      %396 = vmatprep.subr.mxu0 0.0
      %397 = vmatpush1.xpose.msra.mxu0 0.0
      %398 = vmatprep.subr.mxu0 0.0
      %399 = vmatpush1.xpose.msra.mxu0 0.0
      %400 = vmatprep.subr.mxu0 0.0
      %401 = vmatpush1.xpose.msra.mxu0 0.0
      %402 = vmatprep.subr.mxu0 0.0
      %403 = vmatpush1.xpose.msra.mxu0 0.0
      %404 = vmatprep.subr.mxu0 0.0
      %405 = vmatpush1.xpose.msra.mxu0 0.0
      %406 = vmatprep.subr.mxu0 0.0
      %407 = vmatpush1.xpose.msra.mxu0 0.0
      %408 = vmatprep.subr.mxu0 0.0
      %409 = vmatpush1.xpose.msra.mxu0 0.0
      %410 = vmatprep.subr.mxu0 0.0
      %411 = vmatpush1.xpose.msra.mxu0 0.0
      %412 = vmatprep.subr.mxu0 0.0
      %413 = vmatpush1.xpose.msra.mxu0 0.0
      %414 = vmatprep.subr.mxu0 0.0
      %415 = vmatpush1.xpose.msra.mxu0 0.0
      %416 = vmatprep.subr.mxu0 0.0
      %417 = vmatpush1.xpose.msra.mxu0 0.0
      %418 = vmatprep.subr.mxu0 0.0
      %419 = vmatpush1.xpose.msra.mxu0 0.0
      %420 = vmatprep.subr.mxu0 0.0
      %421 = vmatpush1.xpose.msra.mxu0 0.0
      %422 = vmatprep.subr.mxu0 0.0
      %423 = vmatpush1.xpose.msra.mxu0 0.0
      %424 = vmatprep.subr.mxu0 0.0
      %425 = vmatpush1.xpose.msra.mxu0 0.0
      %426 = vmatprep.subr.mxu0 0.0
      %427 = vmatpush1.xpose.msra.mxu0 0.0
      %428 = vmatprep.subr.mxu0 0.0
      %429 = vmatpush1.xpose.msra.mxu0 0.0
      %430 = vmatprep.mubr.f32.mxu0 0.0
      %431 = vmatmul.mubr.f32.gmra.mrb[0].mxu0 %v346
      %v432 = vpop.f32.mrb[0].mxu0
      %v433 = vadd.f32 0.0, %v432
      %v434 = vpop.f32.mrb[0].mxu0
      %435 = vmatprep.mubr.f32.mxu0 0.0
      %436 = vmatmul.mubr.f32.gmra.mrb[0].mxu0 %v349
      %v437 = vpop.f32.mrb[0].mxu0
      %v438 = vadd.f32 0.0, %v437
      %v439 = vpop.f32.mrb[0].mxu0
      %440 = vmatprep.mubr.f32.mxu0 0.0
      %441 = vmatmul.mubr.f32.gmra.mrb[0].mxu0 %v352
      %v442 = vpop.f32.mrb[0].mxu0
      %v443 = vadd.f32 0.0, %v442
      %v444 = vpop.f32.mrb[0].mxu0
      %445 = vmatprep.mubr.f32.mxu0 0.0
      %446 = vmatmul.mubr.f32.gmra.mrb[0].mxu0 %v355
      %v447 = vpop.f32.mrb[0].mxu0
      %v448 = vadd.f32 0.0, %v447
      %v449 = vpop.f32.mrb[0].mxu0
      %450 = vmatprep.mubr.f32.mxu0 0.0
      %451 = vmatmul.mubr.f32.gmra.mrb[0].mxu0 %v358
      %v452 = vpop.f32.mrb[0].mxu0
      %v453 = vadd.f32 0.0, %v452
      %v454 = vpop.f32.mrb[0].mxu0
      %455 = vmatprep.mubr.f32.mxu0 0.0
      %456 = vmatmul.mubr.f32.gmra.mrb[0].mxu0 %v361
      %v457 = vpop.f32.mrb[0].mxu0
      %v458 = vadd.f32 0.0, %v457
      %v459 = vpop.f32.mrb[0].mxu0
      %460 = vdwg.mxu0
      %v462 = vsel %vm344, %v341, 0
      %v465 = vsel %vm344, %v342, 0
      %v468 = vsel %vm344, %v343, 0
      %v471 = vsel %vm344, %v332, 0
      %473 = vmatprep.subr.bf16.mxu0 0
      %474 = vmatpush1.bf16.xpose.msra.mxu0 %v471
      %475 = vmatprep.subr.bf16.mxu0 0
      %476 = vmatpush1.bf16.xpose.msra.mxu0 0
      %477 = vmatprep.subr.bf16.mxu0 0
      %478 = vmatpush1.bf16.xpose.msra.mxu0 0
      %479 = vmatprep.subr.bf16.mxu0 0
      %480 = vmatpush1.bf16.xpose.msra.mxu0 0
      %481 = vmatprep.subr.bf16.mxu0 0
      %482 = vmatpush1.bf16.xpose.msra.mxu0 0
      %483 = vmatprep.subr.bf16.mxu0 0
      %484 = vmatpush1.bf16.xpose.msra.mxu0 0
      %485 = vmatprep.subr.bf16.mxu0 0
      %486 = vmatpush1.bf16.xpose.msra.mxu0 0
      %487 = vmatprep.subr.bf16.mxu0 0
      %488 = vmatpush1.bf16.xpose.msra.mxu0 0
      %489 = vmatprep.subr.bf16.mxu0 0
      %490 = vmatpush1.bf16.xpose.msra.mxu0 0
      %491 = vmatprep.subr.bf16.mxu0 0
      %492 = vmatpush1.bf16.xpose.msra.mxu0 0
      %493 = vmatprep.subr.bf16.mxu0 0
      %494 = vmatpush1.bf16.xpose.msra.mxu0 0
      %495 = vmatprep.subr.bf16.mxu0 0
      %496 = vmatpush1.bf16.xpose.msra.mxu0 0
      %497 = vmatprep.subr.bf16.mxu0 0
      %498 = vmatpush1.bf16.xpose.msra.mxu0 0
      %499 = vmatprep.subr.bf16.mxu0 0
      %500 = vmatpush1.bf16.xpose.msra.mxu0 0
      %501 = vmatprep.subr.bf16.mxu0 0
      %502 = vmatpush1.bf16.xpose.msra.mxu0 0
      %503 = vmatprep.subr.bf16.mxu0 0
      %504 = vmatpush1.bf16.xpose.msra.mxu0 0
      %505 = vmatprep.mubr.bf16.mxu0 0
      %506 = vmatmul.mubr.bf16.gmra.mrb[0].mxu0 %v462
      %v507 = vpop.f32.mrb[0].mxu0
      %v508 = vadd.f32 %v433, %v507
      %v509 = vpop.f32.mrb[0].mxu0
      %v510 = vpop.f32.mrb[0].mxu0
      %v511 = vadd.f32 %v438, %v510
      %v512 = vpop.f32.mrb[0].mxu0
      %513 = vmatprep.mubr.bf16.mxu0 0
      %514 = vmatmul.mubr.bf16.gmra.mrb[0].mxu0 %v465
      %v515 = vpop.f32.mrb[0].mxu0
      %v516 = vadd.f32 %v443, %v515
      %v517 = vpop.f32.mrb[0].mxu0
      %v518 = vpop.f32.mrb[0].mxu0
      %v519 = vadd.f32 %v448, %v518
      %v520 = vpop.f32.mrb[0].mxu0
      %521 = vmatprep.mubr.bf16.mxu0 0
      %522 = vmatmul.mubr.bf16.gmra.mrb[0].mxu0 %v468
      %v523 = vpop.f32.mrb[0].mxu0
      %v524 = vadd.f32 %v453, %v523
      %v525 = vpop.f32.mrb[0].mxu0
      %v526 = vpop.f32.mrb[0].mxu0
      %v527 = vadd.f32 %v458, %v526
      %v528 = vpop.f32.mrb[0].mxu0
      %529 = vdwg.mxu0
      %v530 = vlaneseq
      %v531 = vshrl.u32 %v530, 7
      %v532 = vadd.s32 %v531, 8
      %v533 = vadd.s32 %v531, 16
      %v534 = vlaneseq
      %v535 = vshrl.u32 %v534, 7
      %v536 = vsub.s32 0, %v535
      %v537 = vrot.slane %v329, %v536
      %vm538 = vcmp.eq.s32.totalorder %v531, %v537
      %vm539 = vcmp.eq.s32.totalorder %v532, %v537
      %vm540 = vcmp.eq.s32.totalorder %v533, %v537
      %v541 = vsel %vm538, 1, 0
      %v542 = vsel %vm539, 1, 0
      %v543 = vsel %vm540, 1, 0
      %v544 = vcvt.s32.f32 %v541
      %v545 = vcvt.s32.f32 %v542
      %v546 = vcvt.s32.f32 %v543
      %v547 = vpack.c.bf16 %v545, %v544
      %v548 = vpack.c.bf16 %v546, %v546
      %v549 = vld [vmem:[%s1] sm:$0x1]
      %vm550 = vcmask 162816
      %v552 = vsel %vm550, %v549, 0
      %vm554 = vcmask 1041408
      %v556 = vsel %vm554, %v548, 0
      %558 = vmatprep.subr.bf16.mxu0 0
      %559 = vmatpush1.bf16.msra.mxu0 %v547
      %560 = vmatprep.subr.bf16.mxu0 0
      %561 = vmatpush1.bf16.msra.mxu0 %v556
      %562 = vmatprep.subr.bf16.mxu0 0
      %563 = vmatpush1.bf16.msra.mxu0 0
      %564 = vmatprep.subr.bf16.mxu0 0
      %565 = vmatpush1.bf16.msra.mxu0 0
      %566 = vmatprep.subr.bf16.mxu0 0
      %567 = vmatpush1.bf16.msra.mxu0 0
      %568 = vmatprep.subr.bf16.mxu0 0
      %569 = vmatpush1.bf16.msra.mxu0 0
      %570 = vmatprep.subr.bf16.mxu0 0
      %571 = vmatpush1.bf16.msra.mxu0 0
      %572 = vmatprep.subr.bf16.mxu0 0
      %573 = vmatpush1.bf16.msra.mxu0 0
      %574 = vmatprep.subr.bf16.mxu0 0
      %575 = vmatpush1.bf16.msra.mxu0 0
      %576 = vmatprep.subr.bf16.mxu0 0
      %577 = vmatpush1.bf16.msra.mxu0 0
      %578 = vmatprep.subr.bf16.mxu0 0
      %579 = vmatpush1.bf16.msra.mxu0 0
      %580 = vmatprep.subr.bf16.mxu0 0
      %581 = vmatpush1.bf16.msra.mxu0 0
      %582 = vmatprep.subr.bf16.mxu0 0
      %583 = vmatpush1.bf16.msra.mxu0 0
      %584 = vmatprep.subr.bf16.mxu0 0
      %585 = vmatpush1.bf16.msra.mxu0 0
      %586 = vmatprep.subr.bf16.mxu0 0
      %587 = vmatpush1.bf16.msra.mxu0 0
      %588 = vmatprep.subr.bf16.mxu0 0
      %589 = vmatpush1.bf16.msra.mxu0 0
      %590 = vmatprep.mubr.bf16.mxu0 0
      %591 = vmatmul.mubr.bf16.gmra.mrb[0].mxu0 %v552
      %v592 = vpop.f32.mrb[0].mxu0
      %v593 = vadd.f32 0.0, %v592
      %v594 = vpop.f32.mrb[0].mxu0
      %v595 = vpop.f32.mrb[0].mxu0
      %v596 = vpop.f32.mrb[0].mxu0
      %597 = vdwg.mxu0
      %v598 = vld [vmem:[%s0] sm:$0xf]
      %v599 = vld [vmem:[%s0 + $0x4] sm:$0xf]
      %v600 = vld [vmem:[%s0 + $0x8] sm:$0xf]
      %v601 = vld [vmem:[%s0 + $0xc] sm:$0xf]
      %v602 = vld [vmem:[%s0 + $0x10] sm:$0xf]
      %v603 = vld [vmem:[%s0 + $0x14] sm:$0xf]
      %v604 = vld [vmem:[%s0 + $0x18] sm:$0xf]
      %v605 = vld [vmem:[%s0 + $0x1c] sm:$0xf]
      %v608 = vunpack.c.l.b16 %v598
      %v609 = vunpack.c.l.b16 %v599
      %v610 = vpack.c.b16 %v609, %v608
      %v612 = vsel %vm550, %v610, 0
      %614 = vmatprep.subr.bf16.mxu0 0
      %615 = vmatpush1.bf16.msra.mxu0 %v547
      %616 = vmatprep.subr.bf16.mxu0 0
      %617 = vmatpush1.bf16.msra.mxu0 %v556
      %618 = vmatprep.subr.bf16.mxu0 0
      %619 = vmatpush1.bf16.msra.mxu0 0
      %620 = vmatprep.subr.bf16.mxu0 0
      %621 = vmatpush1.bf16.msra.mxu0 0
      %622 = vmatprep.subr.bf16.mxu0 0
      %623 = vmatpush1.bf16.msra.mxu0 0
      %624 = vmatprep.subr.bf16.mxu0 0
      %625 = vmatpush1.bf16.msra.mxu0 0
      %626 = vmatprep.subr.bf16.mxu0 0
      %627 = vmatpush1.bf16.msra.mxu0 0
      %628 = vmatprep.subr.bf16.mxu0 0
      %629 = vmatpush1.bf16.msra.mxu0 0
      %630 = vmatprep.subr.bf16.mxu0 0
      %631 = vmatpush1.bf16.msra.mxu0 0
      %632 = vmatprep.subr.bf16.mxu0 0
      %633 = vmatpush1.bf16.msra.mxu0 0
      %634 = vmatprep.subr.bf16.mxu0 0
      %635 = vmatpush1.bf16.msra.mxu0 0
      %636 = vmatprep.subr.bf16.mxu0 0
      %637 = vmatpush1.bf16.msra.mxu0 0
      %638 = vmatprep.subr.bf16.mxu0 0
      %639 = vmatpush1.bf16.msra.mxu0 0
      %640 = vmatprep.subr.bf16.mxu0 0
      %641 = vmatpush1.bf16.msra.mxu0 0
      %642 = vmatprep.subr.bf16.mxu0 0
      %643 = vmatpush1.bf16.msra.mxu0 0
      %644 = vmatprep.subr.bf16.mxu0 0
      %645 = vmatpush1.bf16.msra.mxu0 0
      %646 = vmatprep.mubr.bf16.mxu0 0
      %647 = vmatmul.mubr.bf16.gmra.mrb[0].mxu0 %v612
      %v648 = vpop.f32.mrb[0].mxu0
      %v649 = vadd.f32 0.0, %v648
      %v650 = vpop.f32.mrb[0].mxu0
      %v651 = vpop.f32.mrb[0].mxu0
      %v652 = vadd.f32 0.0, %v651
      %v653 = vpop.f32.mrb[0].mxu0
      %654 = vdwg.mxu0
      %v657 = vunpack.c.l.b16 %v600
      %v658 = vunpack.c.l.b16 %v601
      %v659 = vpack.c.b16 %v658, %v657
      %v661 = vsel %vm550, %v659, 0
      %663 = vmatprep.subr.bf16.mxu0 0
      %664 = vmatpush1.bf16.msra.mxu0 %v547
      %665 = vmatprep.subr.bf16.mxu0 0
      %666 = vmatpush1.bf16.msra.mxu0 %v556
      %667 = vmatprep.subr.bf16.mxu0 0
      %668 = vmatpush1.bf16.msra.mxu0 0
      %669 = vmatprep.subr.bf16.mxu0 0
      %670 = vmatpush1.bf16.msra.mxu0 0
      %671 = vmatprep.subr.bf16.mxu0 0
      %672 = vmatpush1.bf16.msra.mxu0 0
      %673 = vmatprep.subr.bf16.mxu0 0
      %674 = vmatpush1.bf16.msra.mxu0 0
      %675 = vmatprep.subr.bf16.mxu0 0
      %676 = vmatpush1.bf16.msra.mxu0 0
      %677 = vmatprep.subr.bf16.mxu0 0
      %678 = vmatpush1.bf16.msra.mxu0 0
      %679 = vmatprep.subr.bf16.mxu0 0
      %680 = vmatpush1.bf16.msra.mxu0 0
      %681 = vmatprep.subr.bf16.mxu0 0
      %682 = vmatpush1.bf16.msra.mxu0 0
      %683 = vmatprep.subr.bf16.mxu0 0
      %684 = vmatpush1.bf16.msra.mxu0 0
      %685 = vmatprep.subr.bf16.mxu0 0
      %686 = vmatpush1.bf16.msra.mxu0 0
      %687 = vmatprep.subr.bf16.mxu0 0
      %688 = vmatpush1.bf16.msra.mxu0 0
      %689 = vmatprep.subr.bf16.mxu0 0
      %690 = vmatpush1.bf16.msra.mxu0 0
      %691 = vmatprep.subr.bf16.mxu0 0
      %692 = vmatpush1.bf16.msra.mxu0 0
      %693 = vmatprep.subr.bf16.mxu0 0
      %694 = vmatpush1.bf16.msra.mxu0 0
      %695 = vmatprep.mubr.bf16.mxu0 0
      %696 = vmatmul.mubr.bf16.gmra.mrb[0].mxu0 %v661
      %v697 = vpop.f32.mrb[0].mxu0
      %v698 = vadd.f32 0.0, %v697
      %v699 = vpop.f32.mrb[0].mxu0
      %v700 = vpop.f32.mrb[0].mxu0
      %v701 = vadd.f32 0.0, %v700
      %v702 = vpop.f32.mrb[0].mxu0
      %703 = vdwg.mxu0
      %v706 = vunpack.c.l.b16 %v602
      %v707 = vunpack.c.l.b16 %v603
      %v708 = vpack.c.b16 %v707, %v706
      %v710 = vsel %vm550, %v708, 0
      %712 = vmatprep.subr.bf16.mxu0 0
      %713 = vmatpush1.bf16.msra.mxu0 %v547
      %714 = vmatprep.subr.bf16.mxu0 0
      %715 = vmatpush1.bf16.msra.mxu0 %v556
      %716 = vmatprep.subr.bf16.mxu0 0
      %717 = vmatpush1.bf16.msra.mxu0 0
      %718 = vmatprep.subr.bf16.mxu0 0
      %719 = vmatpush1.bf16.msra.mxu0 0
      %720 = vmatprep.subr.bf16.mxu0 0
      %721 = vmatpush1.bf16.msra.mxu0 0
      %722 = vmatprep.subr.bf16.mxu0 0
      %723 = vmatpush1.bf16.msra.mxu0 0
      %724 = vmatprep.subr.bf16.mxu0 0
      %725 = vmatpush1.bf16.msra.mxu0 0
      %726 = vmatprep.subr.bf16.mxu0 0
      %727 = vmatpush1.bf16.msra.mxu0 0
      %728 = vmatprep.subr.bf16.mxu0 0
      %729 = vmatpush1.bf16.msra.mxu0 0
      %730 = vmatprep.subr.bf16.mxu0 0
      %731 = vmatpush1.bf16.msra.mxu0 0
      %732 = vmatprep.subr.bf16.mxu0 0
      %733 = vmatpush1.bf16.msra.mxu0 0
      %734 = vmatprep.subr.bf16.mxu0 0
      %735 = vmatpush1.bf16.msra.mxu0 0
      %736 = vmatprep.subr.bf16.mxu0 0
      %737 = vmatpush1.bf16.msra.mxu0 0
      %738 = vmatprep.subr.bf16.mxu0 0
      %739 = vmatpush1.bf16.msra.mxu0 0
      %740 = vmatprep.subr.bf16.mxu0 0
      %741 = vmatpush1.bf16.msra.mxu0 0
      %742 = vmatprep.subr.bf16.mxu0 0
      %743 = vmatpush1.bf16.msra.mxu0 0
      %744 = vmatprep.mubr.bf16.mxu0 0
      %745 = vmatmul.mubr.bf16.gmra.mrb[0].mxu0 %v710
      %v746 = vpop.f32.mrb[0].mxu0
      %v747 = vadd.f32 0.0, %v746
      %v748 = vpop.f32.mrb[0].mxu0
      %v749 = vpop.f32.mrb[0].mxu0
      %v750 = vadd.f32 0.0, %v749
      %v751 = vpop.f32.mrb[0].mxu0
      %752 = vdwg.mxu0
      %v755 = vunpack.c.l.b16 %v604
      %v756 = vunpack.c.l.b16 %v605
      %v757 = vpack.c.b16 %v756, %v755
      %v759 = vsel %vm550, %v757, 0
      %761 = vmatprep.subr.bf16.mxu0 0
      %762 = vmatpush1.bf16.msra.mxu0 %v547
      %763 = vmatprep.subr.bf16.mxu0 0
      %764 = vmatpush1.bf16.msra.mxu0 %v556
      %765 = vmatprep.subr.bf16.mxu0 0
      %766 = vmatpush1.bf16.msra.mxu0 0
      %767 = vmatprep.subr.bf16.mxu0 0
      %768 = vmatpush1.bf16.msra.mxu0 0
      %769 = vmatprep.subr.bf16.mxu0 0
      %770 = vmatpush1.bf16.msra.mxu0 0
      %771 = vmatprep.subr.bf16.mxu0 0
      %772 = vmatpush1.bf16.msra.mxu0 0
      %773 = vmatprep.subr.bf16.mxu0 0
      %774 = vmatpush1.bf16.msra.mxu0 0
      %775 = vmatprep.subr.bf16.mxu0 0
      %776 = vmatpush1.bf16.msra.mxu0 0
      %777 = vmatprep.subr.bf16.mxu0 0
      %778 = vmatpush1.bf16.msra.mxu0 0
      %779 = vmatprep.subr.bf16.mxu0 0
      %780 = vmatpush1.bf16.msra.mxu0 0
      %781 = vmatprep.subr.bf16.mxu0 0
      %782 = vmatpush1.bf16.msra.mxu0 0
      %783 = vmatprep.subr.bf16.mxu0 0
      %784 = vmatpush1.bf16.msra.mxu0 0
      %785 = vmatprep.subr.bf16.mxu0 0
      %786 = vmatpush1.bf16.msra.mxu0 0
      %787 = vmatprep.subr.bf16.mxu0 0
      %788 = vmatpush1.bf16.msra.mxu0 0
      %789 = vmatprep.subr.bf16.mxu0 0
      %790 = vmatpush1.bf16.msra.mxu0 0
      %791 = vmatprep.subr.bf16.mxu0 0
      %792 = vmatpush1.bf16.msra.mxu0 0
      %793 = vmatprep.mubr.bf16.mxu0 0
      %794 = vmatmul.mubr.bf16.gmra.mrb[0].mxu0 %v759
      %v795 = vpop.f32.mrb[0].mxu0
      %v796 = vadd.f32 0.0, %v795
      %v797 = vpop.f32.mrb[0].mxu0
      %v798 = vpop.f32.mrb[0].mxu0
      %v799 = vadd.f32 0.0, %v798
      %v800 = vpop.f32.mrb[0].mxu0
      %801 = vdwg.mxu0
      %v802 = vmul.f32 %v649, %v508
      %v803 = vmul.f32 %v652, %v511
      %v804 = vmul.f32 %v698, %v508
      %v805 = vmul.f32 %v701, %v511
      %v806 = vmul.f32 %v747, %v508
      %v807 = vmul.f32 %v750, %v511
      %v808 = vmul.f32 %v796, %v508
      %v809 = vmul.f32 %v799, %v511
      %vm810 = vcmask 64512
      %v811 = vsel %vm810, %v802, 0.0
      %v812 = vsel %vm810, %v803, 0.0
      %v813 = vadd.f32 %v811, %v812
      %v814 = vrot.slane %v813, 4
      %v815 = vadd.f32 %v813, %v814
      %v816 = vrot.slane %v815, 2
      %v817 = vadd.f32 %v815, %v816
      %v818 = vrot.slane %v817, 1
      %v819 = vadd.f32 %v817, %v818
      %v820 = vsel %vm810, %v804, 0.0
      %v821 = vsel %vm810, %v805, 0.0
      %v822 = vadd.f32 %v820, %v821
      %v823 = vrot.slane %v822, 4
      %v824 = vadd.f32 %v822, %v823
      %v825 = vrot.slane %v824, 2
      %v826 = vadd.f32 %v824, %v825
      %v827 = vrot.slane %v826, 1
      %v828 = vadd.f32 %v826, %v827
      %v829 = vsel %vm810, %v806, 0.0
      %v830 = vsel %vm810, %v807, 0.0
      %v831 = vadd.f32 %v829, %v830
      %v832 = vrot.slane %v831, 4
      %v833 = vadd.f32 %v831, %v832
      %v834 = vrot.slane %v833, 2
      %v835 = vadd.f32 %v833, %v834
      %v836 = vrot.slane %v835, 1
      %v837 = vadd.f32 %v835, %v836
      %v838 = vsel %vm810, %v808, 0.0
      %v839 = vsel %vm810, %v809, 0.0
      %v840 = vadd.f32 %v838, %v839
      %v841 = vrot.slane %v840, 4
      %v842 = vadd.f32 %v840, %v841
      %v843 = vrot.slane %v842, 2
      %v844 = vadd.f32 %v842, %v843
      %v845 = vrot.slane %v844, 1
      %v846 = vadd.f32 %v844, %v845
      %v847 = vmul.f32 %v649, %v516
      %v848 = vmul.f32 %v652, %v519
      %v849 = vmul.f32 %v698, %v516
      %v850 = vmul.f32 %v701, %v519
      %v851 = vmul.f32 %v747, %v516
      %v852 = vmul.f32 %v750, %v519
      %v853 = vmul.f32 %v796, %v516
      %v854 = vmul.f32 %v799, %v519
      %v855 = vsel %vm810, %v847, 0.0
      %v856 = vsel %vm810, %v848, 0.0
      %v857 = vadd.f32 %v855, %v856
      %v858 = vrot.slane %v857, 4
      %v859 = vadd.f32 %v857, %v858
      %v860 = vrot.slane %v859, 2
      %v861 = vadd.f32 %v859, %v860
      %v862 = vrot.slane %v861, 1
      %v863 = vadd.f32 %v861, %v862
      %v864 = vsel %vm810, %v849, 0.0
      %v865 = vsel %vm810, %v850, 0.0
      %v866 = vadd.f32 %v864, %v865
      %v867 = vrot.slane %v866, 4
      %v868 = vadd.f32 %v866, %v867
      %v869 = vrot.slane %v868, 2
      %v870 = vadd.f32 %v868, %v869
      %v871 = vrot.slane %v870, 1
      %v872 = vadd.f32 %v870, %v871
      %v873 = vsel %vm810, %v851, 0.0
      %v874 = vsel %vm810, %v852, 0.0
      %v875 = vadd.f32 %v873, %v874
      %v876 = vrot.slane %v875, 4
      %v877 = vadd.f32 %v875, %v876
      %v878 = vrot.slane %v877, 2
      %v879 = vadd.f32 %v877, %v878
      %v880 = vrot.slane %v879, 1
      %v881 = vadd.f32 %v879, %v880
      %v882 = vsel %vm810, %v853, 0.0
      %v883 = vsel %vm810, %v854, 0.0
      %v884 = vadd.f32 %v882, %v883
      %v885 = vrot.slane %v884, 4
      %v886 = vadd.f32 %v884, %v885
      %v887 = vrot.slane %v886, 2
      %v888 = vadd.f32 %v886, %v887
      %v889 = vrot.slane %v888, 1
      %v890 = vadd.f32 %v888, %v889
      %v891 = vmul.f32 %v649, %v524
      %v892 = vmul.f32 %v652, %v527
      %v893 = vmul.f32 %v698, %v524
      %v894 = vmul.f32 %v701, %v527
      %v895 = vmul.f32 %v747, %v524
      %v896 = vmul.f32 %v750, %v527
      %v897 = vmul.f32 %v796, %v524
      %v898 = vmul.f32 %v799, %v527
      %v899 = vsel %vm810, %v891, 0.0
      %v900 = vsel %vm810, %v892, 0.0
      %v901 = vadd.f32 %v899, %v900
      %v902 = vrot.slane %v901, 4
      %v903 = vadd.f32 %v901, %v902
      %v904 = vrot.slane %v903, 2
      %v905 = vadd.f32 %v903, %v904
      %v906 = vrot.slane %v905, 1
      %v907 = vadd.f32 %v905, %v906
      %v908 = vsel %vm810, %v893, 0.0
      %v909 = vsel %vm810, %v894, 0.0
      %v910 = vadd.f32 %v908, %v909
      %v911 = vrot.slane %v910, 4
      %v912 = vadd.f32 %v910, %v911
      %v913 = vrot.slane %v912, 2
      %v914 = vadd.f32 %v912, %v913
      %v915 = vrot.slane %v914, 1
      %v916 = vadd.f32 %v914, %v915
      %v917 = vsel %vm810, %v895, 0.0
      %v918 = vsel %vm810, %v896, 0.0
      %v919 = vadd.f32 %v917, %v918
      %v920 = vrot.slane %v919, 4
      %v921 = vadd.f32 %v919, %v920
      %v922 = vrot.slane %v921, 2
      %v923 = vadd.f32 %v921, %v922
      %v924 = vrot.slane %v923, 1
      %v925 = vadd.f32 %v923, %v924
      %v926 = vsel %vm810, %v897, 0.0
      %v927 = vsel %vm810, %v898, 0.0
      %v928 = vadd.f32 %v926, %v927
      %v929 = vrot.slane %v928, 4
      %v930 = vadd.f32 %v928, %v929
      %v931 = vrot.slane %v930, 2
      %v932 = vadd.f32 %v930, %v931
      %v933 = vrot.slane %v932, 1
      %v934 = vadd.f32 %v932, %v933
      %s935 = scalar_lea.vmem %s0, 32
      %v936 = vld [vmem:[%s935] sm:$0xf]
      %v937 = vld [vmem:[%s935 + $0x4] sm:$0xf]
      %v938 = vld [vmem:[%s935 + $0x8] sm:$0xf]
      %v939 = vld [vmem:[%s935 + $0xc] sm:$0xf]
      %v940 = vld [vmem:[%s935 + $0x10] sm:$0xf]
      %v941 = vld [vmem:[%s935 + $0x14] sm:$0xf]
      %v942 = vld [vmem:[%s935 + $0x18] sm:$0xf]
      %v943 = vld [vmem:[%s935 + $0x1c] sm:$0xf]
      %v946 = vunpack.c.l.b16 %v936
      %v947 = vunpack.c.l.b16 %v937
      %v948 = vpack.c.b16 %v947, %v946
      %v950 = vsel %vm550, %v948, 0
      %952 = vmatprep.subr.bf16.mxu0 0
      %953 = vmatpush1.bf16.msra.mxu0 %v547
      %954 = vmatprep.subr.bf16.mxu0 0
      %955 = vmatpush1.bf16.msra.mxu0 %v556
      %956 = vmatprep.subr.bf16.mxu0 0
      %957 = vmatpush1.bf16.msra.mxu0 0
      %958 = vmatprep.subr.bf16.mxu0 0
      %959 = vmatpush1.bf16.msra.mxu0 0
      %960 = vmatprep.subr.bf16.mxu0 0
      %961 = vmatpush1.bf16.msra.mxu0 0
      %962 = vmatprep.subr.bf16.mxu0 0
      %963 = vmatpush1.bf16.msra.mxu0 0
      %964 = vmatprep.subr.bf16.mxu0 0
      %965 = vmatpush1.bf16.msra.mxu0 0
      %966 = vmatprep.subr.bf16.mxu0 0
      %967 = vmatpush1.bf16.msra.mxu0 0
      %968 = vmatprep.subr.bf16.mxu0 0
      %969 = vmatpush1.bf16.msra.mxu0 0
      %970 = vmatprep.subr.bf16.mxu0 0
      %971 = vmatpush1.bf16.msra.mxu0 0
      %972 = vmatprep.subr.bf16.mxu0 0
      %973 = vmatpush1.bf16.msra.mxu0 0
      %974 = vmatprep.subr.bf16.mxu0 0
      %975 = vmatpush1.bf16.msra.mxu0 0
      %976 = vmatprep.subr.bf16.mxu0 0
      %977 = vmatpush1.bf16.msra.mxu0 0
      %978 = vmatprep.subr.bf16.mxu0 0
      %979 = vmatpush1.bf16.msra.mxu0 0
      %980 = vmatprep.subr.bf16.mxu0 0
      %981 = vmatpush1.bf16.msra.mxu0 0
      %982 = vmatprep.subr.bf16.mxu0 0
      %983 = vmatpush1.bf16.msra.mxu0 0
      %984 = vmatprep.mubr.bf16.mxu0 0
      %985 = vmatmul.mubr.bf16.gmra.mrb[0].mxu0 %v950
      %v986 = vpop.f32.mrb[0].mxu0
      %v987 = vadd.f32 0.0, %v986
      %v988 = vpop.f32.mrb[0].mxu0
      %v989 = vpop.f32.mrb[0].mxu0
      %v990 = vadd.f32 0.0, %v989
      %v991 = vpop.f32.mrb[0].mxu0
      %992 = vdwg.mxu0
      %v995 = vunpack.c.l.b16 %v938
      %v996 = vunpack.c.l.b16 %v939
      %v997 = vpack.c.b16 %v996, %v995
      %v999 = vsel %vm550, %v997, 0
      %1001 = vmatprep.subr.bf16.mxu0 0
      %1002 = vmatpush1.bf16.msra.mxu0 %v547
      %1003 = vmatprep.subr.bf16.mxu0 0
      %1004 = vmatpush1.bf16.msra.mxu0 %v556
      %1005 = vmatprep.subr.bf16.mxu0 0
      %1006 = vmatpush1.bf16.msra.mxu0 0
      %1007 = vmatprep.subr.bf16.mxu0 0
      %1008 = vmatpush1.bf16.msra.mxu0 0
      %1009 = vmatprep.subr.bf16.mxu0 0
      %1010 = vmatpush1.bf16.msra.mxu0 0
      %1011 = vmatprep.subr.bf16.mxu0 0
      %1012 = vmatpush1.bf16.msra.mxu0 0
      %1013 = vmatprep.subr.bf16.mxu0 0
      %1014 = vmatpush1.bf16.msra.mxu0 0
      %1015 = vmatprep.subr.bf16.mxu0 0
      %1016 = vmatpush1.bf16.msra.mxu0 0
      %1017 = vmatprep.subr.bf16.mxu0 0
      %1018 = vmatpush1.bf16.msra.mxu0 0
      %1019 = vmatprep.subr.bf16.mxu0 0
      %1020 = vmatpush1.bf16.msra.mxu0 0
      %1021 = vmatprep.subr.bf16.mxu0 0
      %1022 = vmatpush1.bf16.msra.mxu0 0
      %1023 = vmatprep.subr.bf16.mxu0 0
      %1024 = vmatpush1.bf16.msra.mxu0 0
      %1025 = vmatprep.subr.bf16.mxu0 0
      %1026 = vmatpush1.bf16.msra.mxu0 0
      %1027 = vmatprep.subr.bf16.mxu0 0
      %1028 = vmatpush1.bf16.msra.mxu0 0
      %1029 = vmatprep.subr.bf16.mxu0 0
      %1030 = vmatpush1.bf16.msra.mxu0 0
      %1031 = vmatprep.subr.bf16.mxu0 0
      %1032 = vmatpush1.bf16.msra.mxu0 0
      %1033 = vmatprep.mubr.bf16.mxu0 0
      %1034 = vmatmul.mubr.bf16.gmra.mrb[0].mxu0 %v999
      %v1035 = vpop.f32.mrb[0].mxu0
      %v1036 = vadd.f32 0.0, %v1035
      %v1037 = vpop.f32.mrb[0].mxu0
      %v1038 = vpop.f32.mrb[0].mxu0
      %v1039 = vadd.f32 0.0, %v1038
      %v1040 = vpop.f32.mrb[0].mxu0
      %1041 = vdwg.mxu0
      %v1044 = vunpack.c.l.b16 %v940
      %v1045 = vunpack.c.l.b16 %v941
      %v1046 = vpack.c.b16 %v1045, %v1044
      %v1048 = vsel %vm550, %v1046, 0
      %1050 = vmatprep.subr.bf16.mxu0 0
      %1051 = vmatpush1.bf16.msra.mxu0 %v547
      %1052 = vmatprep.subr.bf16.mxu0 0
      %1053 = vmatpush1.bf16.msra.mxu0 %v556
      %1054 = vmatprep.subr.bf16.mxu0 0
      %1055 = vmatpush1.bf16.msra.mxu0 0
      %1056 = vmatprep.subr.bf16.mxu0 0
      %1057 = vmatpush1.bf16.msra.mxu0 0
      %1058 = vmatprep.subr.bf16.mxu0 0
      %1059 = vmatpush1.bf16.msra.mxu0 0
      %1060 = vmatprep.subr.bf16.mxu0 0
      %1061 = vmatpush1.bf16.msra.mxu0 0
      %1062 = vmatprep.subr.bf16.mxu0 0
      %1063 = vmatpush1.bf16.msra.mxu0 0
      %1064 = vmatprep.subr.bf16.mxu0 0
      %1065 = vmatpush1.bf16.msra.mxu0 0
      %1066 = vmatprep.subr.bf16.mxu0 0
      %1067 = vmatpush1.bf16.msra.mxu0 0
      %1068 = vmatprep.subr.bf16.mxu0 0
      %1069 = vmatpush1.bf16.msra.mxu0 0
      %1070 = vmatprep.subr.bf16.mxu0 0
      %1071 = vmatpush1.bf16.msra.mxu0 0
      %1072 = vmatprep.subr.bf16.mxu0 0
      %1073 = vmatpush1.bf16.msra.mxu0 0
      %1074 = vmatprep.subr.bf16.mxu0 0
      %1075 = vmatpush1.bf16.msra.mxu0 0
      %1076 = vmatprep.subr.bf16.mxu0 0
      %1077 = vmatpush1.bf16.msra.mxu0 0
      %1078 = vmatprep.subr.bf16.mxu0 0
      %1079 = vmatpush1.bf16.msra.mxu0 0
      %1080 = vmatprep.subr.bf16.mxu0 0
      %1081 = vmatpush1.bf16.msra.mxu0 0
      %1082 = vmatprep.mubr.bf16.mxu0 0
      %1083 = vmatmul.mubr.bf16.gmra.mrb[0].mxu0 %v1048
      %v1084 = vpop.f32.mrb[0].mxu0
      %v1085 = vadd.f32 0.0, %v1084
      %v1086 = vpop.f32.mrb[0].mxu0
      %v1087 = vpop.f32.mrb[0].mxu0
      %v1088 = vadd.f32 0.0, %v1087
      %v1089 = vpop.f32.mrb[0].mxu0
      %1090 = vdwg.mxu0
      %v1093 = vunpack.c.l.b16 %v942
      %v1094 = vunpack.c.l.b16 %v943
      %v1095 = vpack.c.b16 %v1094, %v1093
      %v1097 = vsel %vm550, %v1095, 0
      %1099 = vmatprep.subr.bf16.mxu0 0
      %1100 = vmatpush1.bf16.msra.mxu0 %v547
      %1101 = vmatprep.subr.bf16.mxu0 0
      %1102 = vmatpush1.bf16.msra.mxu0 %v556
      %1103 = vmatprep.subr.bf16.mxu0 0
      %1104 = vmatpush1.bf16.msra.mxu0 0
      %1105 = vmatprep.subr.bf16.mxu0 0
      %1106 = vmatpush1.bf16.msra.mxu0 0
      %1107 = vmatprep.subr.bf16.mxu0 0
      %1108 = vmatpush1.bf16.msra.mxu0 0
      %1109 = vmatprep.subr.bf16.mxu0 0
      %1110 = vmatpush1.bf16.msra.mxu0 0
      %1111 = vmatprep.subr.bf16.mxu0 0
      %1112 = vmatpush1.bf16.msra.mxu0 0
      %1113 = vmatprep.subr.bf16.mxu0 0
      %1114 = vmatpush1.bf16.msra.mxu0 0
      %1115 = vmatprep.subr.bf16.mxu0 0
      %1116 = vmatpush1.bf16.msra.mxu0 0
      %1117 = vmatprep.subr.bf16.mxu0 0
      %1118 = vmatpush1.bf16.msra.mxu0 0
      %1119 = vmatprep.subr.bf16.mxu0 0
      %1120 = vmatpush1.bf16.msra.mxu0 0
      %1121 = vmatprep.subr.bf16.mxu0 0
      %1122 = vmatpush1.bf16.msra.mxu0 0
      %1123 = vmatprep.subr.bf16.mxu0 0
      %1124 = vmatpush1.bf16.msra.mxu0 0
      %1125 = vmatprep.subr.bf16.mxu0 0
      %1126 = vmatpush1.bf16.msra.mxu0 0
      %1127 = vmatprep.subr.bf16.mxu0 0
      %1128 = vmatpush1.bf16.msra.mxu0 0
      %1129 = vmatprep.subr.bf16.mxu0 0
      %1130 = vmatpush1.bf16.msra.mxu0 0
      %1131 = vmatprep.mubr.bf16.mxu0 0
      %1132 = vmatmul.mubr.bf16.gmra.mrb[0].mxu0 %v1097
      %v1133 = vpop.f32.mrb[0].mxu0
      %v1134 = vadd.f32 0.0, %v1133
      %v1135 = vpop.f32.mrb[0].mxu0
      %v1136 = vpop.f32.mrb[0].mxu0
      %v1137 = vadd.f32 0.0, %v1136
      %v1138 = vpop.f32.mrb[0].mxu0
      %1139 = vdwg.mxu0
      %v1140 = vmul.f32 %v987, %v508
      %v1141 = vmul.f32 %v990, %v511
      %v1142 = vmul.f32 %v1036, %v508
      %v1143 = vmul.f32 %v1039, %v511
      %v1144 = vmul.f32 %v1085, %v508
      %v1145 = vmul.f32 %v1088, %v511
      %v1146 = vmul.f32 %v1134, %v508
      %v1147 = vmul.f32 %v1137, %v511
      %v1148 = vsel %vm810, %v1140, 0.0
      %v1149 = vsel %vm810, %v1141, 0.0
      %v1150 = vadd.f32 %v1148, %v1149
      %v1151 = vrot.slane %v1150, 4
      %v1152 = vadd.f32 %v1150, %v1151
      %v1153 = vrot.slane %v1152, 2
      %v1154 = vadd.f32 %v1152, %v1153
      %v1155 = vrot.slane %v1154, 1
      %v1156 = vadd.f32 %v1154, %v1155
      %v1157 = vsel %vm810, %v1142, 0.0
      %v1158 = vsel %vm810, %v1143, 0.0
      %v1159 = vadd.f32 %v1157, %v1158
      %v1160 = vrot.slane %v1159, 4
      %v1161 = vadd.f32 %v1159, %v1160
      %v1162 = vrot.slane %v1161, 2
      %v1163 = vadd.f32 %v1161, %v1162
      %v1164 = vrot.slane %v1163, 1
      %v1165 = vadd.f32 %v1163, %v1164
      %v1166 = vsel %vm810, %v1144, 0.0
      %v1167 = vsel %vm810, %v1145, 0.0
      %v1168 = vadd.f32 %v1166, %v1167
      %v1169 = vrot.slane %v1168, 4
      %v1170 = vadd.f32 %v1168, %v1169
      %v1171 = vrot.slane %v1170, 2
      %v1172 = vadd.f32 %v1170, %v1171
      %v1173 = vrot.slane %v1172, 1
      %v1174 = vadd.f32 %v1172, %v1173
      %v1175 = vsel %vm810, %v1146, 0.0
      %v1176 = vsel %vm810, %v1147, 0.0
      %v1177 = vadd.f32 %v1175, %v1176
      %v1178 = vrot.slane %v1177, 4
      %v1179 = vadd.f32 %v1177, %v1178
      %v1180 = vrot.slane %v1179, 2
      %v1181 = vadd.f32 %v1179, %v1180
      %v1182 = vrot.slane %v1181, 1
      %v1183 = vadd.f32 %v1181, %v1182
      %v1184 = vmul.f32 %v987, %v516
      %v1185 = vmul.f32 %v990, %v519
      %v1186 = vmul.f32 %v1036, %v516
      %v1187 = vmul.f32 %v1039, %v519
      %v1188 = vmul.f32 %v1085, %v516
      %v1189 = vmul.f32 %v1088, %v519
      %v1190 = vmul.f32 %v1134, %v516
      %v1191 = vmul.f32 %v1137, %v519
      %v1192 = vsel %vm810, %v1184, 0.0
      %v1193 = vsel %vm810, %v1185, 0.0
      %v1194 = vadd.f32 %v1192, %v1193
      %v1195 = vrot.slane %v1194, 4
      %v1196 = vadd.f32 %v1194, %v1195
      %v1197 = vrot.slane %v1196, 2
      %v1198 = vadd.f32 %v1196, %v1197
      %v1199 = vrot.slane %v1198, 1
      %v1200 = vadd.f32 %v1198, %v1199
      %v1201 = vsel %vm810, %v1186, 0.0
      %v1202 = vsel %vm810, %v1187, 0.0
      %v1203 = vadd.f32 %v1201, %v1202
      %v1204 = vrot.slane %v1203, 4
      %v1205 = vadd.f32 %v1203, %v1204
      %v1206 = vrot.slane %v1205, 2
      %v1207 = vadd.f32 %v1205, %v1206
      %v1208 = vrot.slane %v1207, 1
      %v1209 = vadd.f32 %v1207, %v1208
      %v1210 = vsel %vm810, %v1188, 0.0
      %v1211 = vsel %vm810, %v1189, 0.0
      %v1212 = vadd.f32 %v1210, %v1211
      %v1213 = vrot.slane %v1212, 4
      %v1214 = vadd.f32 %v1212, %v1213
      %v1215 = vrot.slane %v1214, 2
      %v1216 = vadd.f32 %v1214, %v1215
      %v1217 = vrot.slane %v1216, 1
      %v1218 = vadd.f32 %v1216, %v1217
      %v1219 = vsel %vm810, %v1190, 0.0
      %v1220 = vsel %vm810, %v1191, 0.0
      %v1221 = vadd.f32 %v1219, %v1220
      %v1222 = vrot.slane %v1221, 4
      %v1223 = vadd.f32 %v1221, %v1222
      %v1224 = vrot.slane %v1223, 2
      %v1225 = vadd.f32 %v1223, %v1224
      %v1226 = vrot.slane %v1225, 1
      %v1227 = vadd.f32 %v1225, %v1226
      %v1228 = vmul.f32 %v987, %v524
      %v1229 = vmul.f32 %v990, %v527
      %v1230 = vmul.f32 %v1036, %v524
      %v1231 = vmul.f32 %v1039, %v527
      %v1232 = vmul.f32 %v1085, %v524
      %v1233 = vmul.f32 %v1088, %v527
      %v1234 = vmul.f32 %v1134, %v524
      %v1235 = vmul.f32 %v1137, %v527
      %v1236 = vsel %vm810, %v1228, 0.0
      %v1237 = vsel %vm810, %v1229, 0.0
      %v1238 = vadd.f32 %v1236, %v1237
      %v1239 = vrot.slane %v1238, 4
      %v1240 = vadd.f32 %v1238, %v1239
      %v1241 = vrot.slane %v1240, 2
      %v1242 = vadd.f32 %v1240, %v1241
      %v1243 = vrot.slane %v1242, 1
      %v1244 = vadd.f32 %v1242, %v1243
      %v1245 = vsel %vm810, %v1230, 0.0
      %v1246 = vsel %vm810, %v1231, 0.0
      %v1247 = vadd.f32 %v1245, %v1246
      %v1248 = vrot.slane %v1247, 4
      %v1249 = vadd.f32 %v1247, %v1248
      %v1250 = vrot.slane %v1249, 2
      %v1251 = vadd.f32 %v1249, %v1250
      %v1252 = vrot.slane %v1251, 1
      %v1253 = vadd.f32 %v1251, %v1252
      %v1254 = vsel %vm810, %v1232, 0.0
      %v1255 = vsel %vm810, %v1233, 0.0
      %v1256 = vadd.f32 %v1254, %v1255
      %v1257 = vrot.slane %v1256, 4
      %v1258 = vadd.f32 %v1256, %v1257
      %v1259 = vrot.slane %v1258, 2
      %v1260 = vadd.f32 %v1258, %v1259
      %v1261 = vrot.slane %v1260, 1
      %v1262 = vadd.f32 %v1260, %v1261
      %v1263 = vsel %vm810, %v1234, 0.0
      %v1264 = vsel %vm810, %v1235, 0.0
      %v1265 = vadd.f32 %v1263, %v1264
      %v1266 = vrot.slane %v1265, 4
      %v1267 = vadd.f32 %v1265, %v1266
      %v1268 = vrot.slane %v1267, 2
      %v1269 = vadd.f32 %v1267, %v1268
      %v1270 = vrot.slane %v1269, 1
      %v1271 = vadd.f32 %v1269, %v1270
      %s1272 = scalar_lea.vmem %s0, 64
      %v1273 = vld [vmem:[%s1272] sm:$0xf]
      %v1274 = vld [vmem:[%s1272 + $0x4] sm:$0xf]
      %v1275 = vld [vmem:[%s1272 + $0x8] sm:$0xf]
      %v1276 = vld [vmem:[%s1272 + $0xc] sm:$0xf]
      %v1277 = vld [vmem:[%s1272 + $0x10] sm:$0xf]
      %v1278 = vld [vmem:[%s1272 + $0x14] sm:$0xf]
      %v1279 = vld [vmem:[%s1272 + $0x18] sm:$0xf]
      %v1280 = vld [vmem:[%s1272 + $0x1c] sm:$0xf]
      %v1283 = vunpack.c.l.b16 %v1273
      %v1284 = vunpack.c.l.b16 %v1274
      %v1285 = vpack.c.b16 %v1284, %v1283
      %v1287 = vsel %vm550, %v1285, 0
      %1289 = vmatprep.subr.bf16.mxu0 0
      %1290 = vmatpush1.bf16.msra.mxu0 %v547
      %1291 = vmatprep.subr.bf16.mxu0 0
      %1292 = vmatpush1.bf16.msra.mxu0 %v556
      %1293 = vmatprep.subr.bf16.mxu0 0
      %1294 = vmatpush1.bf16.msra.mxu0 0
      %1295 = vmatprep.subr.bf16.mxu0 0
      %1296 = vmatpush1.bf16.msra.mxu0 0
      %1297 = vmatprep.subr.bf16.mxu0 0
      %1298 = vmatpush1.bf16.msra.mxu0 0
      %1299 = vmatprep.subr.bf16.mxu0 0
      %1300 = vmatpush1.bf16.msra.mxu0 0
      %1301 = vmatprep.subr.bf16.mxu0 0
      %1302 = vmatpush1.bf16.msra.mxu0 0
      %1303 = vmatprep.subr.bf16.mxu0 0
      %1304 = vmatpush1.bf16.msra.mxu0 0
      %1305 = vmatprep.subr.bf16.mxu0 0
      %1306 = vmatpush1.bf16.msra.mxu0 0
      %1307 = vmatprep.subr.bf16.mxu0 0
      %1308 = vmatpush1.bf16.msra.mxu0 0
      %1309 = vmatprep.subr.bf16.mxu0 0
      %1310 = vmatpush1.bf16.msra.mxu0 0
      %1311 = vmatprep.subr.bf16.mxu0 0
      %1312 = vmatpush1.bf16.msra.mxu0 0
      %1313 = vmatprep.subr.bf16.mxu0 0
      %1314 = vmatpush1.bf16.msra.mxu0 0
      %1315 = vmatprep.subr.bf16.mxu0 0
      %1316 = vmatpush1.bf16.msra.mxu0 0
      %1317 = vmatprep.subr.bf16.mxu0 0
      %1318 = vmatpush1.bf16.msra.mxu0 0
      %1319 = vmatprep.subr.bf16.mxu0 0
      %1320 = vmatpush1.bf16.msra.mxu0 0
      %1321 = vmatprep.mubr.bf16.mxu0 0
      %1322 = vmatmul.mubr.bf16.gmra.mrb[0].mxu0 %v1287
      %v1323 = vpop.f32.mrb[0].mxu0
      %v1324 = vadd.f32 0.0, %v1323
      %v1325 = vpop.f32.mrb[0].mxu0
      %v1326 = vpop.f32.mrb[0].mxu0
      %v1327 = vadd.f32 0.0, %v1326
      %v1328 = vpop.f32.mrb[0].mxu0
      %1329 = vdwg.mxu0
      %v1332 = vunpack.c.l.b16 %v1275
      %v1333 = vunpack.c.l.b16 %v1276
      %v1334 = vpack.c.b16 %v1333, %v1332
      %v1336 = vsel %vm550, %v1334, 0
      %1338 = vmatprep.subr.bf16.mxu0 0
      %1339 = vmatpush1.bf16.msra.mxu0 %v547
      %1340 = vmatprep.subr.bf16.mxu0 0
      %1341 = vmatpush1.bf16.msra.mxu0 %v556
      %1342 = vmatprep.subr.bf16.mxu0 0
      %1343 = vmatpush1.bf16.msra.mxu0 0
      %1344 = vmatprep.subr.bf16.mxu0 0
      %1345 = vmatpush1.bf16.msra.mxu0 0
      %1346 = vmatprep.subr.bf16.mxu0 0
      %1347 = vmatpush1.bf16.msra.mxu0 0
      %1348 = vmatprep.subr.bf16.mxu0 0
      %1349 = vmatpush1.bf16.msra.mxu0 0
      %1350 = vmatprep.subr.bf16.mxu0 0
      %1351 = vmatpush1.bf16.msra.mxu0 0
      %1352 = vmatprep.subr.bf16.mxu0 0
      %1353 = vmatpush1.bf16.msra.mxu0 0
      %1354 = vmatprep.subr.bf16.mxu0 0
      %1355 = vmatpush1.bf16.msra.mxu0 0
      %1356 = vmatprep.subr.bf16.mxu0 0
      %1357 = vmatpush1.bf16.msra.mxu0 0
      %1358 = vmatprep.subr.bf16.mxu0 0
      %1359 = vmatpush1.bf16.msra.mxu0 0
      %1360 = vmatprep.subr.bf16.mxu0 0
      %1361 = vmatpush1.bf16.msra.mxu0 0
      %1362 = vmatprep.subr.bf16.mxu0 0
      %1363 = vmatpush1.bf16.msra.mxu0 0
      %1364 = vmatprep.subr.bf16.mxu0 0
      %1365 = vmatpush1.bf16.msra.mxu0 0
      %1366 = vmatprep.subr.bf16.mxu0 0
      %1367 = vmatpush1.bf16.msra.mxu0 0
      %1368 = vmatprep.subr.bf16.mxu0 0
      %1369 = vmatpush1.bf16.msra.mxu0 0
      %1370 = vmatprep.mubr.bf16.mxu0 0
      %1371 = vmatmul.mubr.bf16.gmra.mrb[0].mxu0 %v1336
      %v1372 = vpop.f32.mrb[0].mxu0
      %v1373 = vadd.f32 0.0, %v1372
      %v1374 = vpop.f32.mrb[0].mxu0
      %v1375 = vpop.f32.mrb[0].mxu0
      %v1376 = vadd.f32 0.0, %v1375
      %v1377 = vpop.f32.mrb[0].mxu0
      %1378 = vdwg.mxu0
      %v1381 = vunpack.c.l.b16 %v1277
      %v1382 = vunpack.c.l.b16 %v1278
      %v1383 = vpack.c.b16 %v1382, %v1381
      %v1385 = vsel %vm550, %v1383, 0
      %1387 = vmatprep.subr.bf16.mxu0 0
      %1388 = vmatpush1.bf16.msra.mxu0 %v547
      %1389 = vmatprep.subr.bf16.mxu0 0
      %1390 = vmatpush1.bf16.msra.mxu0 %v556
      %1391 = vmatprep.subr.bf16.mxu0 0
      %1392 = vmatpush1.bf16.msra.mxu0 0
      %1393 = vmatprep.subr.bf16.mxu0 0
      %1394 = vmatpush1.bf16.msra.mxu0 0
      %1395 = vmatprep.subr.bf16.mxu0 0
      %1396 = vmatpush1.bf16.msra.mxu0 0
      %1397 = vmatprep.subr.bf16.mxu0 0
      %1398 = vmatpush1.bf16.msra.mxu0 0
      %1399 = vmatprep.subr.bf16.mxu0 0
      %1400 = vmatpush1.bf16.msra.mxu0 0
      %1401 = vmatprep.subr.bf16.mxu0 0
      %1402 = vmatpush1.bf16.msra.mxu0 0
      %1403 = vmatprep.subr.bf16.mxu0 0
      %1404 = vmatpush1.bf16.msra.mxu0 0
      %1405 = vmatprep.subr.bf16.mxu0 0
      %1406 = vmatpush1.bf16.msra.mxu0 0
      %1407 = vmatprep.subr.bf16.mxu0 0
      %1408 = vmatpush1.bf16.msra.mxu0 0
      %1409 = vmatprep.subr.bf16.mxu0 0
      %1410 = vmatpush1.bf16.msra.mxu0 0
      %1411 = vmatprep.subr.bf16.mxu0 0
      %1412 = vmatpush1.bf16.msra.mxu0 0
      %1413 = vmatprep.subr.bf16.mxu0 0
      %1414 = vmatpush1.bf16.msra.mxu0 0
      %1415 = vmatprep.subr.bf16.mxu0 0
      %1416 = vmatpush1.bf16.msra.mxu0 0
      %1417 = vmatprep.subr.bf16.mxu0 0
      %1418 = vmatpush1.bf16.msra.mxu0 0
      %1419 = vmatprep.mubr.bf16.mxu0 0
      %1420 = vmatmul.mubr.bf16.gmra.mrb[0].mxu0 %v1385
      %v1421 = vpop.f32.mrb[0].mxu0
      %v1422 = vadd.f32 0.0, %v1421
      %v1423 = vpop.f32.mrb[0].mxu0
      %v1424 = vpop.f32.mrb[0].mxu0
      %v1425 = vadd.f32 0.0, %v1424
      %v1426 = vpop.f32.mrb[0].mxu0
      %1427 = vdwg.mxu0
      %v1430 = vunpack.c.l.b16 %v1279
      %v1431 = vunpack.c.l.b16 %v1280
      %v1432 = vpack.c.b16 %v1431, %v1430
      %v1434 = vsel %vm550, %v1432, 0
      %1436 = vmatprep.subr.bf16.mxu0 0
      %1437 = vmatpush1.bf16.msra.mxu0 %v547
      %1438 = vmatprep.subr.bf16.mxu0 0
      %1439 = vmatpush1.bf16.msra.mxu0 %v556
      %1440 = vmatprep.subr.bf16.mxu0 0
      %1441 = vmatpush1.bf16.msra.mxu0 0
      %1442 = vmatprep.subr.bf16.mxu0 0
      %1443 = vmatpush1.bf16.msra.mxu0 0
      %1444 = vmatprep.subr.bf16.mxu0 0
      %1445 = vmatpush1.bf16.msra.mxu0 0
      %1446 = vmatprep.subr.bf16.mxu0 0
      %1447 = vmatpush1.bf16.msra.mxu0 0
      %1448 = vmatprep.subr.bf16.mxu0 0
      %1449 = vmatpush1.bf16.msra.mxu0 0
      %1450 = vmatprep.subr.bf16.mxu0 0
      %1451 = vmatpush1.bf16.msra.mxu0 0
      %1452 = vmatprep.subr.bf16.mxu0 0
      %1453 = vmatpush1.bf16.msra.mxu0 0
      %1454 = vmatprep.subr.bf16.mxu0 0
      %1455 = vmatpush1.bf16.msra.mxu0 0
      %1456 = vmatprep.subr.bf16.mxu0 0
      %1457 = vmatpush1.bf16.msra.mxu0 0
      %1458 = vmatprep.subr.bf16.mxu0 0
      %1459 = vmatpush1.bf16.msra.mxu0 0
      %1460 = vmatprep.subr.bf16.mxu0 0
      %1461 = vmatpush1.bf16.msra.mxu0 0
      %1462 = vmatprep.subr.bf16.mxu0 0
      %1463 = vmatpush1.bf16.msra.mxu0 0
      %1464 = vmatprep.subr.bf16.mxu0 0
      %1465 = vmatpush1.bf16.msra.mxu0 0
      %1466 = vmatprep.subr.bf16.mxu0 0
      %1467 = vmatpush1.bf16.msra.mxu0 0
      %1468 = vmatprep.mubr.bf16.mxu0 0
      %1469 = vmatmul.mubr.bf16.gmra.mrb[0].mxu0 %v1434
      %v1470 = vpop.f32.mrb[0].mxu0
      %v1471 = vadd.f32 0.0, %v1470
      %v1472 = vpop.f32.mrb[0].mxu0
      %v1473 = vpop.f32.mrb[0].mxu0
      %v1474 = vadd.f32 0.0, %v1473
      %v1475 = vpop.f32.mrb[0].mxu0
      %1476 = vdwg.mxu0
      %v1477 = vmul.f32 %v1324, %v508
      %v1478 = vmul.f32 %v1327, %v511
      %v1479 = vmul.f32 %v1373, %v508
      %v1480 = vmul.f32 %v1376, %v511
      %v1481 = vmul.f32 %v1422, %v508
      %v1482 = vmul.f32 %v1425, %v511
      %v1483 = vmul.f32 %v1471, %v508
      %v1484 = vmul.f32 %v1474, %v511
      %v1485 = vsel %vm810, %v1477, 0.0
      %v1486 = vsel %vm810, %v1478, 0.0
      %v1487 = vadd.f32 %v1485, %v1486
      %v1488 = vrot.slane %v1487, 4
      %v1489 = vadd.f32 %v1487, %v1488
      %v1490 = vrot.slane %v1489, 2
      %v1491 = vadd.f32 %v1489, %v1490
      %v1492 = vrot.slane %v1491, 1
      %v1493 = vadd.f32 %v1491, %v1492
      %v1494 = vsel %vm810, %v1479, 0.0
      %v1495 = vsel %vm810, %v1480, 0.0
      %v1496 = vadd.f32 %v1494, %v1495
      %v1497 = vrot.slane %v1496, 4
      %v1498 = vadd.f32 %v1496, %v1497
      %v1499 = vrot.slane %v1498, 2
      %v1500 = vadd.f32 %v1498, %v1499
      %v1501 = vrot.slane %v1500, 1
      %v1502 = vadd.f32 %v1500, %v1501
      %v1503 = vsel %vm810, %v1481, 0.0
      %v1504 = vsel %vm810, %v1482, 0.0
      %v1505 = vadd.f32 %v1503, %v1504
      %v1506 = vrot.slane %v1505, 4
      %v1507 = vadd.f32 %v1505, %v1506
      %v1508 = vrot.slane %v1507, 2
      %v1509 = vadd.f32 %v1507, %v1508
      %v1510 = vrot.slane %v1509, 1
      %v1511 = vadd.f32 %v1509, %v1510
      %v1512 = vsel %vm810, %v1483, 0.0
      %v1513 = vsel %vm810, %v1484, 0.0
      %v1514 = vadd.f32 %v1512, %v1513
      %v1515 = vrot.slane %v1514, 4
      %v1516 = vadd.f32 %v1514, %v1515
      %v1517 = vrot.slane %v1516, 2
      %v1518 = vadd.f32 %v1516, %v1517
      %v1519 = vrot.slane %v1518, 1
      %v1520 = vadd.f32 %v1518, %v1519
      %v1521 = vmul.f32 %v1324, %v516
      %v1522 = vmul.f32 %v1327, %v519
      %v1523 = vmul.f32 %v1373, %v516
      %v1524 = vmul.f32 %v1376, %v519
      %v1525 = vmul.f32 %v1422, %v516
      %v1526 = vmul.f32 %v1425, %v519
      %v1527 = vmul.f32 %v1471, %v516
      %v1528 = vmul.f32 %v1474, %v519
      %v1529 = vsel %vm810, %v1521, 0.0
      %v1530 = vsel %vm810, %v1522, 0.0
      %v1531 = vadd.f32 %v1529, %v1530
      %v1532 = vrot.slane %v1531, 4
      %v1533 = vadd.f32 %v1531, %v1532
      %v1534 = vrot.slane %v1533, 2
      %v1535 = vadd.f32 %v1533, %v1534
      %v1536 = vrot.slane %v1535, 1
      %v1537 = vadd.f32 %v1535, %v1536
      %v1538 = vsel %vm810, %v1523, 0.0
      %v1539 = vsel %vm810, %v1524, 0.0
      %v1540 = vadd.f32 %v1538, %v1539
      %v1541 = vrot.slane %v1540, 4
      %v1542 = vadd.f32 %v1540, %v1541
      %v1543 = vrot.slane %v1542, 2
      %v1544 = vadd.f32 %v1542, %v1543
      %v1545 = vrot.slane %v1544, 1
      %v1546 = vadd.f32 %v1544, %v1545
      %v1547 = vsel %vm810, %v1525, 0.0
      %v1548 = vsel %vm810, %v1526, 0.0
      %v1549 = vadd.f32 %v1547, %v1548
      %v1550 = vrot.slane %v1549, 4
      %v1551 = vadd.f32 %v1549, %v1550
      %v1552 = vrot.slane %v1551, 2
      %v1553 = vadd.f32 %v1551, %v1552
      %v1554 = vrot.slane %v1553, 1
      %v1555 = vadd.f32 %v1553, %v1554
      %v1556 = vsel %vm810, %v1527, 0.0
      %v1557 = vsel %vm810, %v1528, 0.0
      %v1558 = vadd.f32 %v1556, %v1557
      %v1559 = vrot.slane %v1558, 4
      %v1560 = vadd.f32 %v1558, %v1559
      %v1561 = vrot.slane %v1560, 2
      %v1562 = vadd.f32 %v1560, %v1561
      %v1563 = vrot.slane %v1562, 1
      %v1564 = vadd.f32 %v1562, %v1563
      %v1565 = vmul.f32 %v1324, %v524
      %v1566 = vmul.f32 %v1327, %v527
      %v1567 = vmul.f32 %v1373, %v524
      %v1568 = vmul.f32 %v1376, %v527
      %v1569 = vmul.f32 %v1422, %v524
      %v1570 = vmul.f32 %v1425, %v527
      %v1571 = vmul.f32 %v1471, %v524
      %v1572 = vmul.f32 %v1474, %v527
      %v1573 = vsel %vm810, %v1565, 0.0
      %v1574 = vsel %vm810, %v1566, 0.0
      %v1575 = vadd.f32 %v1573, %v1574
      %v1576 = vrot.slane %v1575, 4
      %v1577 = vadd.f32 %v1575, %v1576
      %v1578 = vrot.slane %v1577, 2
      %v1579 = vadd.f32 %v1577, %v1578
      %v1580 = vrot.slane %v1579, 1
      %v1581 = vadd.f32 %v1579, %v1580
      %v1582 = vsel %vm810, %v1567, 0.0
      %v1583 = vsel %vm810, %v1568, 0.0
      %v1584 = vadd.f32 %v1582, %v1583
      %v1585 = vrot.slane %v1584, 4
      %v1586 = vadd.f32 %v1584, %v1585
      %v1587 = vrot.slane %v1586, 2
      %v1588 = vadd.f32 %v1586, %v1587
      %v1589 = vrot.slane %v1588, 1
      %v1590 = vadd.f32 %v1588, %v1589
      %v1591 = vsel %vm810, %v1569, 0.0
      %v1592 = vsel %vm810, %v1570, 0.0
      %v1593 = vadd.f32 %v1591, %v1592
      %v1594 = vrot.slane %v1593, 4
      %v1595 = vadd.f32 %v1593, %v1594
      %v1596 = vrot.slane %v1595, 2
      %v1597 = vadd.f32 %v1595, %v1596
      %v1598 = vrot.slane %v1597, 1
      %v1599 = vadd.f32 %v1597, %v1598
      %v1600 = vsel %vm810, %v1571, 0.0
      %v1601 = vsel %vm810, %v1572, 0.0
      %v1602 = vadd.f32 %v1600, %v1601
      %v1603 = vrot.slane %v1602, 4
      %v1604 = vadd.f32 %v1602, %v1603
      %v1605 = vrot.slane %v1604, 2
      %v1606 = vadd.f32 %v1604, %v1605
      %v1607 = vrot.slane %v1606, 1
      %v1608 = vadd.f32 %v1606, %v1607
      %s1609 = scalar_lea.vmem %s0, 96
      %v1610 = vld [vmem:[%s1609] sm:$0xf]
      %v1611 = vld [vmem:[%s1609 + $0x4] sm:$0xf]
      %v1612 = vld [vmem:[%s1609 + $0x8] sm:$0xf]
      %v1613 = vld [vmem:[%s1609 + $0xc] sm:$0xf]
      %v1614 = vld [vmem:[%s1609 + $0x10] sm:$0xf]
      %v1615 = vld [vmem:[%s1609 + $0x14] sm:$0xf]
      %v1616 = vld [vmem:[%s1609 + $0x18] sm:$0xf]
      %v1617 = vld [vmem:[%s1609 + $0x1c] sm:$0xf]
      %v1620 = vunpack.c.l.b16 %v1610
      %v1621 = vunpack.c.l.b16 %v1611
      %v1622 = vpack.c.b16 %v1621, %v1620
      %v1624 = vsel %vm550, %v1622, 0
      %1626 = vmatprep.subr.bf16.mxu0 0
      %1627 = vmatpush1.bf16.msra.mxu0 %v547
      %1628 = vmatprep.subr.bf16.mxu0 0
      %1629 = vmatpush1.bf16.msra.mxu0 %v556
      %1630 = vmatprep.subr.bf16.mxu0 0
      %1631 = vmatpush1.bf16.msra.mxu0 0
      %1632 = vmatprep.subr.bf16.mxu0 0
      %1633 = vmatpush1.bf16.msra.mxu0 0
      %1634 = vmatprep.subr.bf16.mxu0 0
      %1635 = vmatpush1.bf16.msra.mxu0 0
      %1636 = vmatprep.subr.bf16.mxu0 0
      %1637 = vmatpush1.bf16.msra.mxu0 0
      %1638 = vmatprep.subr.bf16.mxu0 0
      %1639 = vmatpush1.bf16.msra.mxu0 0
      %1640 = vmatprep.subr.bf16.mxu0 0
      %1641 = vmatpush1.bf16.msra.mxu0 0
      %1642 = vmatprep.subr.bf16.mxu0 0
      %1643 = vmatpush1.bf16.msra.mxu0 0
      %1644 = vmatprep.subr.bf16.mxu0 0
      %1645 = vmatpush1.bf16.msra.mxu0 0
      %1646 = vmatprep.subr.bf16.mxu0 0
      %1647 = vmatpush1.bf16.msra.mxu0 0
      %1648 = vmatprep.subr.bf16.mxu0 0
      %1649 = vmatpush1.bf16.msra.mxu0 0
      %1650 = vmatprep.subr.bf16.mxu0 0
      %1651 = vmatpush1.bf16.msra.mxu0 0
      %1652 = vmatprep.subr.bf16.mxu0 0
      %1653 = vmatpush1.bf16.msra.mxu0 0
      %1654 = vmatprep.subr.bf16.mxu0 0
      %1655 = vmatpush1.bf16.msra.mxu0 0
      %1656 = vmatprep.subr.bf16.mxu0 0
      %1657 = vmatpush1.bf16.msra.mxu0 0
      %1658 = vmatprep.mubr.bf16.mxu0 0
      %1659 = vmatmul.mubr.bf16.gmra.mrb[0].mxu0 %v1624
      %v1660 = vpop.f32.mrb[0].mxu0
      %v1661 = vadd.f32 0.0, %v1660
      %v1662 = vpop.f32.mrb[0].mxu0
      %v1663 = vpop.f32.mrb[0].mxu0
      %v1664 = vadd.f32 0.0, %v1663
      %v1665 = vpop.f32.mrb[0].mxu0
      %1666 = vdwg.mxu0
      %v1669 = vunpack.c.l.b16 %v1612
      %v1670 = vunpack.c.l.b16 %v1613
      %v1671 = vpack.c.b16 %v1670, %v1669
      %v1673 = vsel %vm550, %v1671, 0
      %1675 = vmatprep.subr.bf16.mxu0 0
      %1676 = vmatpush1.bf16.msra.mxu0 %v547
      %1677 = vmatprep.subr.bf16.mxu0 0
      %1678 = vmatpush1.bf16.msra.mxu0 %v556
      %1679 = vmatprep.subr.bf16.mxu0 0
      %1680 = vmatpush1.bf16.msra.mxu0 0
      %1681 = vmatprep.subr.bf16.mxu0 0
      %1682 = vmatpush1.bf16.msra.mxu0 0
      %1683 = vmatprep.subr.bf16.mxu0 0
      %1684 = vmatpush1.bf16.msra.mxu0 0
      %1685 = vmatprep.subr.bf16.mxu0 0
      %1686 = vmatpush1.bf16.msra.mxu0 0
      %1687 = vmatprep.subr.bf16.mxu0 0
      %1688 = vmatpush1.bf16.msra.mxu0 0
      %1689 = vmatprep.subr.bf16.mxu0 0
      %1690 = vmatpush1.bf16.msra.mxu0 0
      %1691 = vmatprep.subr.bf16.mxu0 0
      %1692 = vmatpush1.bf16.msra.mxu0 0
      %1693 = vmatprep.subr.bf16.mxu0 0
      %1694 = vmatpush1.bf16.msra.mxu0 0
      %1695 = vmatprep.subr.bf16.mxu0 0
      %1696 = vmatpush1.bf16.msra.mxu0 0
      %1697 = vmatprep.subr.bf16.mxu0 0
      %1698 = vmatpush1.bf16.msra.mxu0 0
      %1699 = vmatprep.subr.bf16.mxu0 0
      %1700 = vmatpush1.bf16.msra.mxu0 0
      %1701 = vmatprep.subr.bf16.mxu0 0
      %1702 = vmatpush1.bf16.msra.mxu0 0
      %1703 = vmatprep.subr.bf16.mxu0 0
      %1704 = vmatpush1.bf16.msra.mxu0 0
      %1705 = vmatprep.subr.bf16.mxu0 0
      %1706 = vmatpush1.bf16.msra.mxu0 0
      %1707 = vmatprep.mubr.bf16.mxu0 0
      %1708 = vmatmul.mubr.bf16.gmra.mrb[0].mxu0 %v1673
      %v1709 = vpop.f32.mrb[0].mxu0
      %v1710 = vadd.f32 0.0, %v1709
      %v1711 = vpop.f32.mrb[0].mxu0
      %v1712 = vpop.f32.mrb[0].mxu0
      %v1713 = vadd.f32 0.0, %v1712
      %v1714 = vpop.f32.mrb[0].mxu0
      %1715 = vdwg.mxu0
      %v1718 = vunpack.c.l.b16 %v1614
      %v1719 = vunpack.c.l.b16 %v1615
      %v1720 = vpack.c.b16 %v1719, %v1718
      %v1722 = vsel %vm550, %v1720, 0
      %1724 = vmatprep.subr.bf16.mxu0 0
      %1725 = vmatpush1.bf16.msra.mxu0 %v547
      %1726 = vmatprep.subr.bf16.mxu0 0
      %1727 = vmatpush1.bf16.msra.mxu0 %v556
      %1728 = vmatprep.subr.bf16.mxu0 0
      %1729 = vmatpush1.bf16.msra.mxu0 0
      %1730 = vmatprep.subr.bf16.mxu0 0
      %1731 = vmatpush1.bf16.msra.mxu0 0
      %1732 = vmatprep.subr.bf16.mxu0 0
      %1733 = vmatpush1.bf16.msra.mxu0 0
      %1734 = vmatprep.subr.bf16.mxu0 0
      %1735 = vmatpush1.bf16.msra.mxu0 0
      %1736 = vmatprep.subr.bf16.mxu0 0
      %1737 = vmatpush1.bf16.msra.mxu0 0
      %1738 = vmatprep.subr.bf16.mxu0 0
      %1739 = vmatpush1.bf16.msra.mxu0 0
      %1740 = vmatprep.subr.bf16.mxu0 0
      %1741 = vmatpush1.bf16.msra.mxu0 0
      %1742 = vmatprep.subr.bf16.mxu0 0
      %1743 = vmatpush1.bf16.msra.mxu0 0
      %1744 = vmatprep.subr.bf16.mxu0 0
      %1745 = vmatpush1.bf16.msra.mxu0 0
      %1746 = vmatprep.subr.bf16.mxu0 0
      %1747 = vmatpush1.bf16.msra.mxu0 0
      %1748 = vmatprep.subr.bf16.mxu0 0
      %1749 = vmatpush1.bf16.msra.mxu0 0
      %1750 = vmatprep.subr.bf16.mxu0 0
      %1751 = vmatpush1.bf16.msra.mxu0 0
      %1752 = vmatprep.subr.bf16.mxu0 0
      %1753 = vmatpush1.bf16.msra.mxu0 0
      %1754 = vmatprep.subr.bf16.mxu0 0
      %1755 = vmatpush1.bf16.msra.mxu0 0
      %1756 = vmatprep.mubr.bf16.mxu0 0
      %1757 = vmatmul.mubr.bf16.gmra.mrb[0].mxu0 %v1722
      %v1758 = vpop.f32.mrb[0].mxu0
      %v1759 = vadd.f32 0.0, %v1758
      %v1760 = vpop.f32.mrb[0].mxu0
      %v1761 = vpop.f32.mrb[0].mxu0
      %v1762 = vadd.f32 0.0, %v1761
      %v1763 = vpop.f32.mrb[0].mxu0
      %1764 = vdwg.mxu0
      %v1767 = vunpack.c.l.b16 %v1616
      %v1768 = vunpack.c.l.b16 %v1617
      %v1769 = vpack.c.b16 %v1768, %v1767
      %v1771 = vsel %vm550, %v1769, 0
      %1773 = vmatprep.subr.bf16.mxu0 0
      %1774 = vmatpush1.bf16.msra.mxu0 %v547
      %1775 = vmatprep.subr.bf16.mxu0 0
      %1776 = vmatpush1.bf16.msra.mxu0 %v556
      %1777 = vmatprep.subr.bf16.mxu0 0
      %1778 = vmatpush1.bf16.msra.mxu0 0
      %1779 = vmatprep.subr.bf16.mxu0 0
      %1780 = vmatpush1.bf16.msra.mxu0 0
      %1781 = vmatprep.subr.bf16.mxu0 0
      %1782 = vmatpush1.bf16.msra.mxu0 0
      %1783 = vmatprep.subr.bf16.mxu0 0
      %1784 = vmatpush1.bf16.msra.mxu0 0
      %1785 = vmatprep.subr.bf16.mxu0 0
      %1786 = vmatpush1.bf16.msra.mxu0 0
      %1787 = vmatprep.subr.bf16.mxu0 0
      %1788 = vmatpush1.bf16.msra.mxu0 0
      %1789 = vmatprep.subr.bf16.mxu0 0
      %1790 = vmatpush1.bf16.msra.mxu0 0
      %1791 = vmatprep.subr.bf16.mxu0 0
      %1792 = vmatpush1.bf16.msra.mxu0 0
      %1793 = vmatprep.subr.bf16.mxu0 0
      %1794 = vmatpush1.bf16.msra.mxu0 0
      %1795 = vmatprep.subr.bf16.mxu0 0
      %1796 = vmatpush1.bf16.msra.mxu0 0
      %1797 = vmatprep.subr.bf16.mxu0 0
      %1798 = vmatpush1.bf16.msra.mxu0 0
      %1799 = vmatprep.subr.bf16.mxu0 0
      %1800 = vmatpush1.bf16.msra.mxu0 0
      %1801 = vmatprep.subr.bf16.mxu0 0
      %1802 = vmatpush1.bf16.msra.mxu0 0
      %1803 = vmatprep.subr.bf16.mxu0 0
      %1804 = vmatpush1.bf16.msra.mxu0 0
      %1805 = vmatprep.mubr.bf16.mxu0 0
      %1806 = vmatmul.mubr.bf16.gmra.mrb[0].mxu0 %v1771
      %v1807 = vpop.f32.mrb[0].mxu0
      %v1808 = vadd.f32 0.0, %v1807
      %v1809 = vpop.f32.mrb[0].mxu0
      %v1810 = vpop.f32.mrb[0].mxu0
      %v1811 = vadd.f32 0.0, %v1810
      %v1812 = vpop.f32.mrb[0].mxu0
      %1813 = vdwg.mxu0
      %v1814 = vmul.f32 %v1661, %v508
      %v1815 = vmul.f32 %v1664, %v511
      %v1816 = vmul.f32 %v1710, %v508
      %v1817 = vmul.f32 %v1713, %v511
      %v1818 = vmul.f32 %v1759, %v508
      %v1819 = vmul.f32 %v1762, %v511
      %v1820 = vmul.f32 %v1808, %v508
      %v1821 = vmul.f32 %v1811, %v511
      %v1822 = vsel %vm810, %v1814, 0.0
      %v1823 = vsel %vm810, %v1815, 0.0
      %v1824 = vadd.f32 %v1822, %v1823
      %v1825 = vrot.slane %v1824, 4
      %v1826 = vadd.f32 %v1824, %v1825
      %v1827 = vrot.slane %v1826, 2
      %v1828 = vadd.f32 %v1826, %v1827
      %v1829 = vrot.slane %v1828, 1
      %v1830 = vadd.f32 %v1828, %v1829
      %v1831 = vsel %vm810, %v1816, 0.0
      %v1832 = vsel %vm810, %v1817, 0.0
      %v1833 = vadd.f32 %v1831, %v1832
      %v1834 = vrot.slane %v1833, 4
      %v1835 = vadd.f32 %v1833, %v1834
      %v1836 = vrot.slane %v1835, 2
      %v1837 = vadd.f32 %v1835, %v1836
      %v1838 = vrot.slane %v1837, 1
      %v1839 = vadd.f32 %v1837, %v1838
      %v1840 = vsel %vm810, %v1818, 0.0
      %v1841 = vsel %vm810, %v1819, 0.0
      %v1842 = vadd.f32 %v1840, %v1841
      %v1843 = vrot.slane %v1842, 4
      %v1844 = vadd.f32 %v1842, %v1843
      %v1845 = vrot.slane %v1844, 2
      %v1846 = vadd.f32 %v1844, %v1845
      %v1847 = vrot.slane %v1846, 1
      %v1848 = vadd.f32 %v1846, %v1847
      %v1849 = vsel %vm810, %v1820, 0.0
      %v1850 = vsel %vm810, %v1821, 0.0
      %v1851 = vadd.f32 %v1849, %v1850
      %v1852 = vrot.slane %v1851, 4
      %v1853 = vadd.f32 %v1851, %v1852
      %v1854 = vrot.slane %v1853, 2
      %v1855 = vadd.f32 %v1853, %v1854
      %v1856 = vrot.slane %v1855, 1
      %v1857 = vadd.f32 %v1855, %v1856
      %v1858 = vmul.f32 %v1661, %v516
      %v1859 = vmul.f32 %v1664, %v519
      %v1860 = vmul.f32 %v1710, %v516
      %v1861 = vmul.f32 %v1713, %v519
      %v1862 = vmul.f32 %v1759, %v516
      %v1863 = vmul.f32 %v1762, %v519
      %v1864 = vmul.f32 %v1808, %v516
      %v1865 = vmul.f32 %v1811, %v519
      %v1866 = vsel %vm810, %v1858, 0.0
      %v1867 = vsel %vm810, %v1859, 0.0
      %v1868 = vadd.f32 %v1866, %v1867
      %v1869 = vrot.slane %v1868, 4
      %v1870 = vadd.f32 %v1868, %v1869
      %v1871 = vrot.slane %v1870, 2
      %v1872 = vadd.f32 %v1870, %v1871
      %v1873 = vrot.slane %v1872, 1
      %v1874 = vadd.f32 %v1872, %v1873
      %v1875 = vsel %vm810, %v1860, 0.0
      %v1876 = vsel %vm810, %v1861, 0.0
      %v1877 = vadd.f32 %v1875, %v1876
      %v1878 = vrot.slane %v1877, 4
      %v1879 = vadd.f32 %v1877, %v1878
      %v1880 = vrot.slane %v1879, 2
      %v1881 = vadd.f32 %v1879, %v1880
      %v1882 = vrot.slane %v1881, 1
      %v1883 = vadd.f32 %v1881, %v1882
      %v1884 = vsel %vm810, %v1862, 0.0
      %v1885 = vsel %vm810, %v1863, 0.0
      %v1886 = vadd.f32 %v1884, %v1885
      %v1887 = vrot.slane %v1886, 4
      %v1888 = vadd.f32 %v1886, %v1887
      %v1889 = vrot.slane %v1888, 2
      %v1890 = vadd.f32 %v1888, %v1889
      %v1891 = vrot.slane %v1890, 1
      %v1892 = vadd.f32 %v1890, %v1891
      %v1893 = vsel %vm810, %v1864, 0.0
      %v1894 = vsel %vm810, %v1865, 0.0
      %v1895 = vadd.f32 %v1893, %v1894
      %v1896 = vrot.slane %v1895, 4
      %v1897 = vadd.f32 %v1895, %v1896
      %v1898 = vrot.slane %v1897, 2
      %v1899 = vadd.f32 %v1897, %v1898
      %v1900 = vrot.slane %v1899, 1
      %v1901 = vadd.f32 %v1899, %v1900
      %v1902 = vmul.f32 %v1661, %v524
      %v1903 = vmul.f32 %v1664, %v527
      %v1904 = vmul.f32 %v1710, %v524
      %v1905 = vmul.f32 %v1713, %v527
      %v1906 = vmul.f32 %v1759, %v524
      %v1907 = vmul.f32 %v1762, %v527
      %v1908 = vmul.f32 %v1808, %v524
      %v1909 = vmul.f32 %v1811, %v527
      %v1910 = vsel %vm810, %v1902, 0.0
      %v1911 = vsel %vm810, %v1903, 0.0
      %v1912 = vadd.f32 %v1910, %v1911
      %v1913 = vrot.slane %v1912, 4
      %v1914 = vadd.f32 %v1912, %v1913
      %v1915 = vrot.slane %v1914, 2
      %v1916 = vadd.f32 %v1914, %v1915
      %v1917 = vrot.slane %v1916, 1
      %v1918 = vadd.f32 %v1916, %v1917
      %v1919 = vsel %vm810, %v1904, 0.0
      %v1920 = vsel %vm810, %v1905, 0.0
      %v1921 = vadd.f32 %v1919, %v1920
      %v1922 = vrot.slane %v1921, 4
      %v1923 = vadd.f32 %v1921, %v1922
      %v1924 = vrot.slane %v1923, 2
      %v1925 = vadd.f32 %v1923, %v1924
      %v1926 = vrot.slane %v1925, 1
      %v1927 = vadd.f32 %v1925, %v1926
      %v1928 = vsel %vm810, %v1906, 0.0
      %v1929 = vsel %vm810, %v1907, 0.0
      %v1930 = vadd.f32 %v1928, %v1929
      %v1931 = vrot.slane %v1930, 4
      %v1932 = vadd.f32 %v1930, %v1931
      %v1933 = vrot.slane %v1932, 2
      %v1934 = vadd.f32 %v1932, %v1933
      %v1935 = vrot.slane %v1934, 1
      %v1936 = vadd.f32 %v1934, %v1935
      %v1937 = vsel %vm810, %v1908, 0.0
      %v1938 = vsel %vm810, %v1909, 0.0
      %v1939 = vadd.f32 %v1937, %v1938
      %v1940 = vrot.slane %v1939, 4
      %v1941 = vadd.f32 %v1939, %v1940
      %v1942 = vrot.slane %v1941, 2
      %v1943 = vadd.f32 %v1941, %v1942
      %v1944 = vrot.slane %v1943, 1
      %v1945 = vadd.f32 %v1943, %v1944
      %v1946 = vsub.f32 %v1156, %v819
      %v1947 = vsub.f32 %v1165, %v828
      %v1948 = vsub.f32 %v1174, %v837
      %v1949 = vsub.f32 %v1183, %v846
      %v1950 = vsub.f32 %v1200, %v863
      %v1951 = vsub.f32 %v1209, %v872
      %v1952 = vsub.f32 %v1218, %v881
      %v1953 = vsub.f32 %v1227, %v890
      %v1954 = vsub.f32 %v1244, %v907
      %v1955 = vsub.f32 %v1253, %v916
      %v1956 = vsub.f32 %v1262, %v925
      %v1957 = vsub.f32 %v1271, %v934
      %v1958 = vmul.f32 %v1946, %v1946
      %v1959 = vmul.f32 %v1947, %v1947
      %v1960 = vmul.f32 %v1948, %v1948
      %v1961 = vmul.f32 %v1949, %v1949
      %v1962 = vmul.f32 %v1950, %v1950
      %v1963 = vmul.f32 %v1951, %v1951
      %v1964 = vmul.f32 %v1952, %v1952
      %v1965 = vmul.f32 %v1953, %v1953
      %v1966 = vadd.f32 %v1958, %v1962
      %v1967 = vadd.f32 %v1959, %v1963
      %v1968 = vadd.f32 %v1960, %v1964
      %v1969 = vadd.f32 %v1961, %v1965
      %v1970 = vmul.f32 %v1954, %v1954
      %v1971 = vmul.f32 %v1955, %v1955
      %v1972 = vmul.f32 %v1956, %v1956
      %v1973 = vmul.f32 %v1957, %v1957
      %v1974 = vadd.f32 %v1966, %v1970
      %v1975 = vadd.f32 %v1967, %v1971
      %v1976 = vadd.f32 %v1968, %v1972
      %v1977 = vadd.f32 %v1969, %v1973
      %v1978 = vadd.f32 %v1974, 1e-06
      %v1979 = vadd.f32 %v1975, 1e-06
      %v1980 = vadd.f32 %v1976, 1e-06
      %v1981 = vadd.f32 %v1977, 1e-06
      %v1982 = vrsqrt.pop %v1978
      %v1983 = vrsqrt.pop %v1979
      %v1984 = vrsqrt.pop %v1980
      %v1985 = vrsqrt.pop %v1981
      %v1986 = vmul.f32 %v1946, %v1982
      %v1987 = vmul.f32 %v1947, %v1983
      %v1988 = vmul.f32 %v1948, %v1984
      %v1989 = vmul.f32 %v1949, %v1985
      %v1990 = vmul.f32 %v1950, %v1982
      %v1991 = vmul.f32 %v1951, %v1983
      %v1992 = vmul.f32 %v1952, %v1984
      %v1993 = vmul.f32 %v1953, %v1985
      %v1994 = vmul.f32 %v1954, %v1982
      %v1995 = vmul.f32 %v1955, %v1983
      %v1996 = vmul.f32 %v1956, %v1984
      %v1997 = vmul.f32 %v1957, %v1985
      %v1998 = vsub.f32 %v1493, %v1156
      %v1999 = vsub.f32 %v1502, %v1165
      %v2000 = vsub.f32 %v1511, %v1174
      %v2001 = vsub.f32 %v1520, %v1183
      %v2002 = vsub.f32 %v1537, %v1200
      %v2003 = vsub.f32 %v1546, %v1209
      %v2004 = vsub.f32 %v1555, %v1218
      %v2005 = vsub.f32 %v1564, %v1227
      %v2006 = vsub.f32 %v1581, %v1244
      %v2007 = vsub.f32 %v1590, %v1253
      %v2008 = vsub.f32 %v1599, %v1262
      %v2009 = vsub.f32 %v1608, %v1271
      %v2010 = vmul.f32 %v1998, %v1998
      %v2011 = vmul.f32 %v1999, %v1999
      %v2012 = vmul.f32 %v2000, %v2000
      %v2013 = vmul.f32 %v2001, %v2001
      %v2014 = vmul.f32 %v2002, %v2002
      %v2015 = vmul.f32 %v2003, %v2003
      %v2016 = vmul.f32 %v2004, %v2004
      %v2017 = vmul.f32 %v2005, %v2005
      %v2018 = vadd.f32 %v2010, %v2014
      %v2019 = vadd.f32 %v2011, %v2015
      %v2020 = vadd.f32 %v2012, %v2016
      %v2021 = vadd.f32 %v2013, %v2017
      %v2022 = vmul.f32 %v2006, %v2006
      %v2023 = vmul.f32 %v2007, %v2007
      %v2024 = vmul.f32 %v2008, %v2008
      %v2025 = vmul.f32 %v2009, %v2009
      %v2026 = vadd.f32 %v2018, %v2022
      %v2027 = vadd.f32 %v2019, %v2023
      %v2028 = vadd.f32 %v2020, %v2024
      %v2029 = vadd.f32 %v2021, %v2025
      %v2030 = vadd.f32 %v2026, 1e-06
      %v2031 = vadd.f32 %v2027, 1e-06
      %v2032 = vadd.f32 %v2028, 1e-06
      %v2033 = vadd.f32 %v2029, 1e-06
      %v2034 = vrsqrt.pop %v2030
      %v2035 = vrsqrt.pop %v2031
      %v2036 = vrsqrt.pop %v2032
      %v2037 = vrsqrt.pop %v2033
      %v2038 = vmul.f32 %v1998, %v2034
      %v2039 = vmul.f32 %v1999, %v2035
      %v2040 = vmul.f32 %v2000, %v2036
      %v2041 = vmul.f32 %v2001, %v2037
      %v2042 = vmul.f32 %v2002, %v2034
      %v2043 = vmul.f32 %v2003, %v2035
      %v2044 = vmul.f32 %v2004, %v2036
      %v2045 = vmul.f32 %v2005, %v2037
      %v2046 = vmul.f32 %v2006, %v2034
      %v2047 = vmul.f32 %v2007, %v2035
      %v2048 = vmul.f32 %v2008, %v2036
      %v2049 = vmul.f32 %v2009, %v2037
      %v2050 = vsub.f32 %v1830, %v1493
      %v2051 = vsub.f32 %v1839, %v1502
      %v2052 = vsub.f32 %v1848, %v1511
      %v2053 = vsub.f32 %v1857, %v1520
      %v2054 = vsub.f32 %v1874, %v1537
      %v2055 = vsub.f32 %v1883, %v1546
      %v2056 = vsub.f32 %v1892, %v1555
      %v2057 = vsub.f32 %v1901, %v1564
      %v2058 = vsub.f32 %v1918, %v1581
      %v2059 = vsub.f32 %v1927, %v1590
      %v2060 = vsub.f32 %v1936, %v1599
      %v2061 = vsub.f32 %v1945, %v1608
      %v2062 = vmul.f32 %v2050, %v2050
      %v2063 = vmul.f32 %v2051, %v2051
      %v2064 = vmul.f32 %v2052, %v2052
      %v2065 = vmul.f32 %v2053, %v2053
      %v2066 = vmul.f32 %v2054, %v2054
      %v2067 = vmul.f32 %v2055, %v2055
      %v2068 = vmul.f32 %v2056, %v2056
      %v2069 = vmul.f32 %v2057, %v2057
      %v2070 = vadd.f32 %v2062, %v2066
      %v2071 = vadd.f32 %v2063, %v2067
      %v2072 = vadd.f32 %v2064, %v2068
      %v2073 = vadd.f32 %v2065, %v2069
      %v2074 = vmul.f32 %v2058, %v2058
      %v2075 = vmul.f32 %v2059, %v2059
      %v2076 = vmul.f32 %v2060, %v2060
      %v2077 = vmul.f32 %v2061, %v2061
      %v2078 = vadd.f32 %v2070, %v2074
      %v2079 = vadd.f32 %v2071, %v2075
      %v2080 = vadd.f32 %v2072, %v2076
      %v2081 = vadd.f32 %v2073, %v2077
      %v2082 = vadd.f32 %v2078, 1e-06
      %v2083 = vadd.f32 %v2079, 1e-06
      %v2084 = vadd.f32 %v2080, 1e-06
      %v2085 = vadd.f32 %v2081, 1e-06
      %v2086 = vrsqrt.pop %v2082
      %v2087 = vrsqrt.pop %v2083
      %v2088 = vrsqrt.pop %v2084
      %v2089 = vrsqrt.pop %v2085
      %v2090 = vmul.f32 %v2050, %v2086
      %v2091 = vmul.f32 %v2051, %v2087
      %v2092 = vmul.f32 %v2052, %v2088
      %v2093 = vmul.f32 %v2053, %v2089
      %v2094 = vmul.f32 %v2054, %v2086
      %v2095 = vmul.f32 %v2055, %v2087
      %v2096 = vmul.f32 %v2056, %v2088
      %v2097 = vmul.f32 %v2057, %v2089
      %v2098 = vmul.f32 %v2058, %v2086
      %v2099 = vmul.f32 %v2059, %v2087
      %v2100 = vmul.f32 %v2060, %v2088
      %v2101 = vmul.f32 %v2061, %v2089
      %v2102 = vmul.f32 %v1990, %v2046
      %v2103 = vmul.f32 %v1991, %v2047
      %v2104 = vmul.f32 %v1992, %v2048
      %v2105 = vmul.f32 %v1993, %v2049
      %v2106 = vmul.f32 %v1994, %v2042
      %v2107 = vmul.f32 %v1995, %v2043
      %v2108 = vmul.f32 %v1996, %v2044
      %v2109 = vmul.f32 %v1997, %v2045
      %v2110 = vsub.f32 %v2102, %v2106
      %v2111 = vsub.f32 %v2103, %v2107
      %v2112 = vsub.f32 %v2104, %v2108
      %v2113 = vsub.f32 %v2105, %v2109
      %v2114 = vmul.f32 %v1994, %v2038
      %v2115 = vmul.f32 %v1995, %v2039
      %v2116 = vmul.f32 %v1996, %v2040
      %v2117 = vmul.f32 %v1997, %v2041
      %v2118 = vmul.f32 %v1986, %v2046
      %v2119 = vmul.f32 %v1987, %v2047
      %v2120 = vmul.f32 %v1988, %v2048
      %v2121 = vmul.f32 %v1989, %v2049
      %v2122 = vsub.f32 %v2114, %v2118
      %v2123 = vsub.f32 %v2115, %v2119
      %v2124 = vsub.f32 %v2116, %v2120
      %v2125 = vsub.f32 %v2117, %v2121
      %v2126 = vmul.f32 %v1986, %v2042
      %v2127 = vmul.f32 %v1987, %v2043
      %v2128 = vmul.f32 %v1988, %v2044
      %v2129 = vmul.f32 %v1989, %v2045
      %v2130 = vmul.f32 %v1990, %v2038
      %v2131 = vmul.f32 %v1991, %v2039
      %v2132 = vmul.f32 %v1992, %v2040
      %v2133 = vmul.f32 %v1993, %v2041
      %v2134 = vsub.f32 %v2126, %v2130
      %v2135 = vsub.f32 %v2127, %v2131
      %v2136 = vsub.f32 %v2128, %v2132
      %v2137 = vsub.f32 %v2129, %v2133
      %v2138 = vmul.f32 %v2110, %v2110
      %v2139 = vmul.f32 %v2111, %v2111
      %v2140 = vmul.f32 %v2112, %v2112
      %v2141 = vmul.f32 %v2113, %v2113
      %v2142 = vmul.f32 %v2122, %v2122
      %v2143 = vmul.f32 %v2123, %v2123
      %v2144 = vmul.f32 %v2124, %v2124
      %v2145 = vmul.f32 %v2125, %v2125
      %v2146 = vadd.f32 %v2138, %v2142
      %v2147 = vadd.f32 %v2139, %v2143
      %v2148 = vadd.f32 %v2140, %v2144
      %v2149 = vadd.f32 %v2141, %v2145
      %v2150 = vmul.f32 %v2134, %v2134
      %v2151 = vmul.f32 %v2135, %v2135
      %v2152 = vmul.f32 %v2136, %v2136
      %v2153 = vmul.f32 %v2137, %v2137
      %v2154 = vadd.f32 %v2146, %v2150
      %v2155 = vadd.f32 %v2147, %v2151
      %v2156 = vadd.f32 %v2148, %v2152
      %v2157 = vadd.f32 %v2149, %v2153
      %v2158 = vadd.f32 %v2154, 1e-06
      %v2159 = vadd.f32 %v2155, 1e-06
      %v2160 = vadd.f32 %v2156, 1e-06
      %v2161 = vadd.f32 %v2157, 1e-06
      %v2162 = vrsqrt.pop %v2158
      %v2163 = vrsqrt.pop %v2159
      %v2164 = vrsqrt.pop %v2160
      %v2165 = vrsqrt.pop %v2161
      %v2166 = vmul.f32 %v2110, %v2162
      %v2167 = vmul.f32 %v2111, %v2163
      %v2168 = vmul.f32 %v2112, %v2164
      %v2169 = vmul.f32 %v2113, %v2165
      %v2170 = vmul.f32 %v2122, %v2162
      %v2171 = vmul.f32 %v2123, %v2163
      %v2172 = vmul.f32 %v2124, %v2164
      %v2173 = vmul.f32 %v2125, %v2165
      %v2174 = vmul.f32 %v2134, %v2162
      %v2175 = vmul.f32 %v2135, %v2163
      %v2176 = vmul.f32 %v2136, %v2164
      %v2177 = vmul.f32 %v2137, %v2165
      %v2178 = vmul.f32 %v2042, %v2098
      %v2179 = vmul.f32 %v2043, %v2099
      %v2180 = vmul.f32 %v2044, %v2100
      %v2181 = vmul.f32 %v2045, %v2101
      %v2182 = vmul.f32 %v2046, %v2094
      %v2183 = vmul.f32 %v2047, %v2095
      %v2184 = vmul.f32 %v2048, %v2096
      %v2185 = vmul.f32 %v2049, %v2097
      %v2186 = vsub.f32 %v2178, %v2182
      %v2187 = vsub.f32 %v2179, %v2183
      %v2188 = vsub.f32 %v2180, %v2184
      %v2189 = vsub.f32 %v2181, %v2185
      %v2190 = vmul.f32 %v2046, %v2090
      %v2191 = vmul.f32 %v2047, %v2091
      %v2192 = vmul.f32 %v2048, %v2092
      %v2193 = vmul.f32 %v2049, %v2093
      %v2194 = vmul.f32 %v2038, %v2098
      %v2195 = vmul.f32 %v2039, %v2099
      %v2196 = vmul.f32 %v2040, %v2100
      %v2197 = vmul.f32 %v2041, %v2101
      %v2198 = vsub.f32 %v2190, %v2194
      %v2199 = vsub.f32 %v2191, %v2195
      %v2200 = vsub.f32 %v2192, %v2196
      %v2201 = vsub.f32 %v2193, %v2197
      %v2202 = vmul.f32 %v2038, %v2094
      %v2203 = vmul.f32 %v2039, %v2095
      %v2204 = vmul.f32 %v2040, %v2096
      %v2205 = vmul.f32 %v2041, %v2097
      %v2206 = vmul.f32 %v2042, %v2090
      %v2207 = vmul.f32 %v2043, %v2091
      %v2208 = vmul.f32 %v2044, %v2092
      %v2209 = vmul.f32 %v2045, %v2093
      %v2210 = vsub.f32 %v2202, %v2206
      %v2211 = vsub.f32 %v2203, %v2207
      %v2212 = vsub.f32 %v2204, %v2208
      %v2213 = vsub.f32 %v2205, %v2209
      %v2214 = vmul.f32 %v2186, %v2186
      %v2215 = vmul.f32 %v2187, %v2187
      %v2216 = vmul.f32 %v2188, %v2188
      %v2217 = vmul.f32 %v2189, %v2189
      %v2218 = vmul.f32 %v2198, %v2198
      %v2219 = vmul.f32 %v2199, %v2199
      %v2220 = vmul.f32 %v2200, %v2200
      %v2221 = vmul.f32 %v2201, %v2201
      %v2222 = vadd.f32 %v2214, %v2218
      %v2223 = vadd.f32 %v2215, %v2219
      %v2224 = vadd.f32 %v2216, %v2220
      %v2225 = vadd.f32 %v2217, %v2221
      %v2226 = vmul.f32 %v2210, %v2210
      %v2227 = vmul.f32 %v2211, %v2211
      %v2228 = vmul.f32 %v2212, %v2212
      %v2229 = vmul.f32 %v2213, %v2213
      %v2230 = vadd.f32 %v2222, %v2226
      %v2231 = vadd.f32 %v2223, %v2227
      %v2232 = vadd.f32 %v2224, %v2228
      %v2233 = vadd.f32 %v2225, %v2229
      %v2234 = vadd.f32 %v2230, 1e-06
      %v2235 = vadd.f32 %v2231, 1e-06
      %v2236 = vadd.f32 %v2232, 1e-06
      %v2237 = vadd.f32 %v2233, 1e-06
      %v2238 = vrsqrt.pop %v2234
      %v2239 = vrsqrt.pop %v2235
      %v2240 = vrsqrt.pop %v2236
      %v2241 = vrsqrt.pop %v2237
      %v2242 = vmul.f32 %v2186, %v2238
      %v2243 = vmul.f32 %v2187, %v2239
      %v2244 = vmul.f32 %v2188, %v2240
      %v2245 = vmul.f32 %v2189, %v2241
      %v2246 = vmul.f32 %v2198, %v2238
      %v2247 = vmul.f32 %v2199, %v2239
      %v2248 = vmul.f32 %v2200, %v2240
      %v2249 = vmul.f32 %v2201, %v2241
      %v2250 = vmul.f32 %v2210, %v2238
      %v2251 = vmul.f32 %v2211, %v2239
      %v2252 = vmul.f32 %v2212, %v2240
      %v2253 = vmul.f32 %v2213, %v2241
      %v2254 = vmul.f32 %v2166, %v2242
      %v2255 = vmul.f32 %v2167, %v2243
      %v2256 = vmul.f32 %v2168, %v2244
      %v2257 = vmul.f32 %v2169, %v2245
      %v2258 = vmul.f32 %v2170, %v2246
      %v2259 = vmul.f32 %v2171, %v2247
      %v2260 = vmul.f32 %v2172, %v2248
      %v2261 = vmul.f32 %v2173, %v2249
      %v2262 = vadd.f32 %v2254, %v2258
      %v2263 = vadd.f32 %v2255, %v2259
      %v2264 = vadd.f32 %v2256, %v2260
      %v2265 = vadd.f32 %v2257, %v2261
      %v2266 = vmul.f32 %v2174, %v2250
      %v2267 = vmul.f32 %v2175, %v2251
      %v2268 = vmul.f32 %v2176, %v2252
      %v2269 = vmul.f32 %v2177, %v2253
      %v2270 = vadd.f32 %v2262, %v2266
      %v2271 = vadd.f32 %v2263, %v2267
      %v2272 = vadd.f32 %v2264, %v2268
      %v2273 = vadd.f32 %v2265, %v2269
      %v2274 = vmul.f32 %v2170, %v2250
      %v2275 = vmul.f32 %v2171, %v2251
      %v2276 = vmul.f32 %v2172, %v2252
      %v2277 = vmul.f32 %v2173, %v2253
      %v2278 = vmul.f32 %v2174, %v2246
      %v2279 = vmul.f32 %v2175, %v2247
      %v2280 = vmul.f32 %v2176, %v2248
      %v2281 = vmul.f32 %v2177, %v2249
      %v2282 = vsub.f32 %v2274, %v2278
      %v2283 = vsub.f32 %v2275, %v2279
      %v2284 = vsub.f32 %v2276, %v2280
      %v2285 = vsub.f32 %v2277, %v2281
      %v2286 = vmul.f32 %v2174, %v2242
      %v2287 = vmul.f32 %v2175, %v2243
      %v2288 = vmul.f32 %v2176, %v2244
      %v2289 = vmul.f32 %v2177, %v2245
      %v2290 = vmul.f32 %v2166, %v2250
      %v2291 = vmul.f32 %v2167, %v2251
      %v2292 = vmul.f32 %v2168, %v2252
      %v2293 = vmul.f32 %v2169, %v2253
      %v2294 = vsub.f32 %v2286, %v2290
      %v2295 = vsub.f32 %v2287, %v2291
      %v2296 = vsub.f32 %v2288, %v2292
      %v2297 = vsub.f32 %v2289, %v2293
      %v2298 = vmul.f32 %v2166, %v2246
      %v2299 = vmul.f32 %v2167, %v2247
      %v2300 = vmul.f32 %v2168, %v2248
      %v2301 = vmul.f32 %v2169, %v2249
      %v2302 = vmul.f32 %v2170, %v2242
      %v2303 = vmul.f32 %v2171, %v2243
      %v2304 = vmul.f32 %v2172, %v2244
      %v2305 = vmul.f32 %v2173, %v2245
      %v2306 = vsub.f32 %v2298, %v2302
      %v2307 = vsub.f32 %v2299, %v2303
      %v2308 = vsub.f32 %v2300, %v2304
      %v2309 = vsub.f32 %v2301, %v2305
      %v2310 = vmul.f32 %v2282, %v2038
      %v2311 = vmul.f32 %v2283, %v2039
      %v2312 = vmul.f32 %v2284, %v2040
      %v2313 = vmul.f32 %v2285, %v2041
      %v2314 = vmul.f32 %v2294, %v2042
      %v2315 = vmul.f32 %v2295, %v2043
      %v2316 = vmul.f32 %v2296, %v2044
      %v2317 = vmul.f32 %v2297, %v2045
      %v2318 = vadd.f32 %v2310, %v2314
      %v2319 = vadd.f32 %v2311, %v2315
      %v2320 = vadd.f32 %v2312, %v2316
      %v2321 = vadd.f32 %v2313, %v2317
      %v2322 = vmul.f32 %v2306, %v2046
      %v2323 = vmul.f32 %v2307, %v2047
      %v2324 = vmul.f32 %v2308, %v2048
      %v2325 = vmul.f32 %v2309, %v2049
      %v2326 = vadd.f32 %v2318, %v2322
      %v2327 = vadd.f32 %v2319, %v2323
      %v2328 = vadd.f32 %v2320, %v2324
      %v2329 = vadd.f32 %v2321, %v2325
      %v2330 = vand.u32 2147483647, %v2270
      %v2331 = vand.u32 2147483647, %v2326
      %v2332 = vmin.f32 %v2330, %v2331
      %v2333 = vmax.f32 %v2330, %v2331
      %v2334 = vrcp.pop %v2333
      %v2335 = vmul.f32 %v2332, %v2334
      %v2336 = vmul.f32 %v2335, %v2335
      %v2337 = vmul.f32 0.002785687, %v2336
      %v2338 = vadd.f32 %v2337, -0.015866
      %v2339 = vmul.f32 %v2338, %v2336
      %v2340 = vadd.f32 %v2339, 0.04247222
      %v2341 = vmul.f32 %v2340, %v2336
      %v2342 = vadd.f32 %v2341, -0.074975304
      %v2343 = vmul.f32 %v2342, %v2336
      %v2344 = vadd.f32 %v2343, 0.1064488
      %v2345 = vmul.f32 %v2344, %v2336
      %v2346 = vadd.f32 %v2345, -0.14207031
      %v2347 = vmul.f32 %v2346, %v2336
      %v2348 = vadd.f32 %v2347, 0.19993454
      %v2349 = vmul.f32 %v2348, %v2336
      %v2350 = vadd.f32 %v2349, -0.33333147
      %v2351 = vmul.f32 %v2350, %v2336
      %v2352 = vmul.f32 %v2351, %v2335
      %v2353 = vadd.f32 %v2352, %v2335
      %vm2354 = vcmp.gt.f32.partialorder %v2331, %v2330
      %v2355 = vsub.f32 1.5707964, %v2353
      %v2356 = vsel %vm2354, %v2355, %v2353
      %vm2357 = vcmp.lt.f32.partialorder %v2270, 0.0
      %v2358 = vsub.f32 3.1415927, %v2356
      %v2359 = vsel %vm2357, %v2358, %v2356
      %vm2360 = vcmp.lt.s32.totalorder %v2270, 0
      %v2361 = vsel %vm2360, 3.1415927, 0.0
      %vm2362 = vcmp.eq.f32.partialorder %v2326, 0.0
      %v2363 = vsel %vm2362, %v2361, %v2359
      %vm2364 = vcmp.ne.f32.partialorder %v2270, %v2270
      %vm2365 = vcmp.ne.f32.partialorder %v2326, %v2326
      %vm2366 = vmor %vm2364, %vm2365
      %v2367 = vsel %vm2366, nan, %v2363
      %vm2368 = vcmp.lt.f32.partialorder %v2270, 0.0
      %v2369 = vsel %vm2368, 2.3561945, 0.7853982
      %vm2370 = vcmp.eq.s32.totalorder %v2330, inf
      %vm2371 = vcmp.eq.s32.totalorder %v2331, inf
      %vm2372 = vmand %vm2370, %vm2371
      %v2373 = vsel %vm2372, %v2369, %v2367
      %v2374 = vand.u32 2147483647, %v2373
      %v2375 = vand.u32 %v2326, 2147483648
      %v2376 = vor.u32 %v2374, %v2375
      %v2377 = vand.u32 2147483647, %v2271
      %v2378 = vand.u32 2147483647, %v2327
      %v2379 = vmin.f32 %v2377, %v2378
      %v2380 = vmax.f32 %v2377, %v2378
      %v2381 = vrcp.pop %v2380
      %v2382 = vmul.f32 %v2379, %v2381
      %v2383 = vmul.f32 %v2382, %v2382
      %v2384 = vmul.f32 0.002785687, %v2383
      %v2385 = vadd.f32 %v2384, -0.015866
      %v2386 = vmul.f32 %v2385, %v2383
      %v2387 = vadd.f32 %v2386, 0.04247222
      %v2388 = vmul.f32 %v2387, %v2383
      %v2389 = vadd.f32 %v2388, -0.074975304
      %v2390 = vmul.f32 %v2389, %v2383
      %v2391 = vadd.f32 %v2390, 0.1064488
      %v2392 = vmul.f32 %v2391, %v2383
      %v2393 = vadd.f32 %v2392, -0.14207031
      %v2394 = vmul.f32 %v2393, %v2383
      %v2395 = vadd.f32 %v2394, 0.19993454
      %v2396 = vmul.f32 %v2395, %v2383
      %v2397 = vadd.f32 %v2396, -0.33333147
      %v2398 = vmul.f32 %v2397, %v2383
      %v2399 = vmul.f32 %v2398, %v2382
      %v2400 = vadd.f32 %v2399, %v2382
      %vm2401 = vcmp.gt.f32.partialorder %v2378, %v2377
      %v2402 = vsub.f32 1.5707964, %v2400
      %v2403 = vsel %vm2401, %v2402, %v2400
      %vm2404 = vcmp.lt.f32.partialorder %v2271, 0.0
      %v2405 = vsub.f32 3.1415927, %v2403
      %v2406 = vsel %vm2404, %v2405, %v2403
      %vm2407 = vcmp.lt.s32.totalorder %v2271, 0
      %v2408 = vsel %vm2407, 3.1415927, 0.0
      %vm2409 = vcmp.eq.f32.partialorder %v2327, 0.0
      %v2410 = vsel %vm2409, %v2408, %v2406
      %vm2411 = vcmp.ne.f32.partialorder %v2271, %v2271
      %vm2412 = vcmp.ne.f32.partialorder %v2327, %v2327
      %vm2413 = vmor %vm2411, %vm2412
      %v2414 = vsel %vm2413, nan, %v2410
      %vm2415 = vcmp.lt.f32.partialorder %v2271, 0.0
      %v2416 = vsel %vm2415, 2.3561945, 0.7853982
      %vm2417 = vcmp.eq.s32.totalorder %v2377, inf
      %vm2418 = vcmp.eq.s32.totalorder %v2378, inf
      %vm2419 = vmand %vm2417, %vm2418
      %v2420 = vsel %vm2419, %v2416, %v2414
      %v2421 = vand.u32 2147483647, %v2420
      %v2422 = vand.u32 %v2327, 2147483648
      %v2423 = vor.u32 %v2421, %v2422
      %v2424 = vand.u32 2147483647, %v2272
      %v2425 = vand.u32 2147483647, %v2328
      %v2426 = vmin.f32 %v2424, %v2425
      %v2427 = vmax.f32 %v2424, %v2425
      %v2428 = vrcp.pop %v2427
      %v2429 = vmul.f32 %v2426, %v2428
      %v2430 = vmul.f32 %v2429, %v2429
      %v2431 = vmul.f32 0.002785687, %v2430
      %v2432 = vadd.f32 %v2431, -0.015866
      %v2433 = vmul.f32 %v2432, %v2430
      %v2434 = vadd.f32 %v2433, 0.04247222
      %v2435 = vmul.f32 %v2434, %v2430
      %v2436 = vadd.f32 %v2435, -0.074975304
      %v2437 = vmul.f32 %v2436, %v2430
      %v2438 = vadd.f32 %v2437, 0.1064488
      %v2439 = vmul.f32 %v2438, %v2430
      %v2440 = vadd.f32 %v2439, -0.14207031
      %v2441 = vmul.f32 %v2440, %v2430
      %v2442 = vadd.f32 %v2441, 0.19993454
      %v2443 = vmul.f32 %v2442, %v2430
      %v2444 = vadd.f32 %v2443, -0.33333147
      %v2445 = vmul.f32 %v2444, %v2430
      %v2446 = vmul.f32 %v2445, %v2429
      %v2447 = vadd.f32 %v2446, %v2429
      %vm2448 = vcmp.gt.f32.partialorder %v2425, %v2424
      %v2449 = vsub.f32 1.5707964, %v2447
      %v2450 = vsel %vm2448, %v2449, %v2447
      %vm2451 = vcmp.lt.f32.partialorder %v2272, 0.0
      %v2452 = vsub.f32 3.1415927, %v2450
      %v2453 = vsel %vm2451, %v2452, %v2450
      %vm2454 = vcmp.lt.s32.totalorder %v2272, 0
      %v2455 = vsel %vm2454, 3.1415927, 0.0
      %vm2456 = vcmp.eq.f32.partialorder %v2328, 0.0
      %v2457 = vsel %vm2456, %v2455, %v2453
      %vm2458 = vcmp.ne.f32.partialorder %v2272, %v2272
      %vm2459 = vcmp.ne.f32.partialorder %v2328, %v2328
      %vm2460 = vmor %vm2458, %vm2459
      %v2461 = vsel %vm2460, nan, %v2457
      %vm2462 = vcmp.lt.f32.partialorder %v2272, 0.0
      %v2463 = vsel %vm2462, 2.3561945, 0.7853982
      %vm2464 = vcmp.eq.s32.totalorder %v2424, inf
      %vm2465 = vcmp.eq.s32.totalorder %v2425, inf
      %vm2466 = vmand %vm2464, %vm2465
      %v2467 = vsel %vm2466, %v2463, %v2461
      %v2468 = vand.u32 2147483647, %v2467
      %v2469 = vand.u32 %v2328, 2147483648
      %v2470 = vor.u32 %v2468, %v2469
      %v2471 = vand.u32 2147483647, %v2273
      %v2472 = vand.u32 2147483647, %v2329
      %v2473 = vmin.f32 %v2471, %v2472
      %v2474 = vmax.f32 %v2471, %v2472
      %v2475 = vrcp.pop %v2474
      %v2476 = vmul.f32 %v2473, %v2475
      %v2477 = vmul.f32 %v2476, %v2476
      %v2478 = vmul.f32 0.002785687, %v2477
      %v2479 = vadd.f32 %v2478, -0.015866
      %v2480 = vmul.f32 %v2479, %v2477
      %v2481 = vadd.f32 %v2480, 0.04247222
      %v2482 = vmul.f32 %v2481, %v2477
      %v2483 = vadd.f32 %v2482, -0.074975304
      %v2484 = vmul.f32 %v2483, %v2477
      %v2485 = vadd.f32 %v2484, 0.1064488
      %v2486 = vmul.f32 %v2485, %v2477
      %v2487 = vadd.f32 %v2486, -0.14207031
      %v2488 = vmul.f32 %v2487, %v2477
      %v2489 = vadd.f32 %v2488, 0.19993454
      %v2490 = vmul.f32 %v2489, %v2477
      %v2491 = vadd.f32 %v2490, -0.33333147
      %v2492 = vmul.f32 %v2491, %v2477
      %v2493 = vmul.f32 %v2492, %v2476
      %v2494 = vadd.f32 %v2493, %v2476
      %vm2495 = vcmp.gt.f32.partialorder %v2472, %v2471
      %v2496 = vsub.f32 1.5707964, %v2494
      %v2497 = vsel %vm2495, %v2496, %v2494
      %vm2498 = vcmp.lt.f32.partialorder %v2273, 0.0
      %v2499 = vsub.f32 3.1415927, %v2497
      %v2500 = vsel %vm2498, %v2499, %v2497
      %vm2501 = vcmp.lt.s32.totalorder %v2273, 0
      %v2502 = vsel %vm2501, 3.1415927, 0.0
      %vm2503 = vcmp.eq.f32.partialorder %v2329, 0.0
      %v2504 = vsel %vm2503, %v2502, %v2500
      %vm2505 = vcmp.ne.f32.partialorder %v2273, %v2273
      %vm2506 = vcmp.ne.f32.partialorder %v2329, %v2329
      %vm2507 = vmor %vm2505, %vm2506
      %v2508 = vsel %vm2507, nan, %v2504
      %vm2509 = vcmp.lt.f32.partialorder %v2273, 0.0
      %v2510 = vsel %vm2509, 2.3561945, 0.7853982
      %vm2511 = vcmp.eq.s32.totalorder %v2471, inf
      %vm2512 = vcmp.eq.s32.totalorder %v2472, inf
      %vm2513 = vmand %vm2511, %vm2512
      %v2514 = vsel %vm2513, %v2510, %v2508
      %v2515 = vand.u32 2147483647, %v2514
      %v2516 = vand.u32 %v2329, 2147483648
      %v2517 = vor.u32 %v2515, %v2516
      %v2518 = vlaneseq
      %v2519 = vshrl.u32 %v2518, 7
      %v2520 = vsub.s32 0, %v2519
      %v2521 = vrot.slane %v330, %v2520
      %vm2522 = vcmp.gt.s32.totalorder %v2521, 0
      %v2523 = vlaneseq
      %v2524 = vshrl.u32 %v2523, 7
      %v2525 = vsub.s32 0, %v2524
      %v2526 = vrot.slane %v593, %v2525
      %v2527 = vsel %vm2522, %v2526, 0.0
      %v2528 = vcvt.s32.f32 %v531
      %vm2529 = vcmp.lt.f32.partialorder %v2528, %v2527
      %v2530 = vsel %vm2529, 1, 0
      %v2531 = vcvt.s32.f32 %v2530
      %v2533 = vrot.slane %v2531, 1
      %v2534 = vrot.slane %v2531, 2
      %v2535 = vrot.slane %v2531, 3
      %v2540 = vmul.f32 %v2376, %v2531
      %v2541 = vmul.f32 %v2423, %v2533
      %v2542 = vmul.f32 %v2470, %v2534
      %v2543 = vmul.f32 %v2517, %v2535
      %v2548 = vrot.slane %v2541, 7
      %vm2549 = vcmask 1041409
      %v2550 = vsel %vm2549, %v2548, %v2540
      %v2551 = vrot.slane %v2542, 6
      %vm2552 = vcmask 1042434
      %v2553 = vsel %vm2552, %v2551, %v2550
      %v2554 = vrot.slane %v2543, 5
      %vm2555 = vcmask 1043459
      %v2556 = vsel %vm2555, %v2554, %v2553
      %v2558 = vrot.slane %v2531, 4
      %vm2560 = vcmask 1043456
      %v2561 = vsel %vm2560, %v2556, %v2558
      %2562 = vst.msk [vmem:[%s327] sm:$0xff] %vm810, %v2561
      %p2563 = scmp.lt.s32.totalorder %s21, 1
      %s2564 = scalar_select %p2563, %s21, 1
      %p2565 = scmp.lt.s32.totalorder %s22, 0
      %s2566 = scalar_select %p2565, %s22, 0
      %s2567 = sadd.s32 %s2566, %s2564
      %s2568 = smul.addr %s2567, 8
      %s2569 = scalar_lea.vmem %s6, %s2568
      // Predicated region
      $region45: #{chi_angles.1} parent=43 // pred_check
        %p2570 = pneg %p196
      $region46: #{chi_angles.1} parent=43 // pred_check_branch
        %2572 = sbr.rel (%p2570) target = $region48
      $region47: #{chi_angles.1} parent=43 // pred_region
        _
      $region48: #{chi_angles.1} parent=43 // pred_fallthru
        _
    $region44: #{chi_angles.1} parent=5 // pred_fallthru
      _
    %p2573 = scmp.le.s32.totalorder 2, %s12
    // Predicated region
    $region49: #{chi_angles.1} parent=5 // pred_check
      %p2574 = pneg %p2573
    $region50: #{chi_angles.1} parent=5 // pred_check_branch
      %2576 = sbr.rel (%p2574) target = $region52
    $region51: #{chi_angles.1} parent=5 // pred_region
      %s2577 = ssub.s32 %s12, 2
      // Predicated region
      $region53: #{chi_angles.1} parent=51 // pred_check
        %p2578 = pneg %p202
      $region54: #{chi_angles.1} parent=51 // pred_check_branch
        %2580 = sbr.rel (%p2578) target = $region56
      $region55: #{chi_angles.1} parent=51 // pred_region
        %p2581 = scmp.lt.s32.totalorder %s23, 1
        %s2582 = scalar_select %p2581, %s23, 1
        %p2583 = scmp.lt.s32.totalorder %s24, 0
        %s2584 = scalar_select %p2583, %s24, 0
        %s2585 = sadd.s32 %s2584, %s2582
        %s2586 = smul.addr %s2585, 8
        %s2587 = scalar_lea.vmem %s6, %s2586
      $region56: #{chi_angles.1} parent=51 // pred_fallthru
        _
    $region52: #{chi_angles.1} parent=5 // pred_fallthru
      _
  $region6: #{chi_angles.1} parent=0 // loop_footer
    %s16 = sadd.s32 1, %s12
  $region7: #{chi_angles.1} parent=0 // loop_footer_branch
    %11 = sbr.rel target = $region3
  $region8: #{chi_angles.1} parent=0 // loop_exit
    _

</llo_original>
